<compile_context>
chip_gen: v7x
topology: tpu7x:2x2x1
jax: 0.10.0
libtpu: 0.0.40
codegen_flags: <defaults>
</compile_context>

<pallas_src>
import jax
import jax.numpy as jnp
from jax import lax
from jax.experimental import pallas as pl
from jax.experimental.pallas import tpu as pltpu

C = 256            # in_channels == n_out (hardcoded in MultiKernel.__init__)
F = 4              # n_filters
KS = (3, 5, 7)     # branch kernel sizes
NB = len(KS)
N_BLOCKS = 3
MAXPAD = max(k // 2 for k in KS)        # 3
N_SHIFTS = 2 * MAXPAD + 1               # 7
EPS = 1e-5


def _fused_blocks_kernel(x_ref, a_ref, bpre_ref, m_ref, s2_ref, c_ref, chk_ref):
    """Bt batch elements per grid step; all N_BLOCKS blocks unrolled inside."""
    bt, L, Cc = x_ref.shape
    M = bt * L
    n_blocks = m_ref.shape[0]
    W = a_ref.shape[1]                   # 36 = n_blocks * NB * F
    wb = W // n_blocks                   # 12 columns per block

    x = x_ref[...].reshape(M, Cc)        # bf16; layout-free (last dim unchanged)
    x_f32 = x.astype(jnp.float32)        # f32 copy for the residual/bn2 path

    # --- ONE MXU dot for all 9 branch pre-convs (k=1) of all 3 blocks (K=256).
    # Branch BN scale/shift + conv bias are pre-folded into a_ref / bpre_ref.
    y = jnp.dot(x, a_ref[...], preferred_element_type=jnp.float32)
    y = jnp.maximum(y + bpre_ref[...], 0.0)              # (M, 36) f32

    # --- Shifted copies for the ks={3,5,7} taps, built ONCE (hoisted out of
    # the block loop).  Roll on the flattened row axis + per-row (rows % L)
    # boundary mask keeps every shifted value inside its own example.
    l_idx = lax.broadcasted_iota(jnp.int32, (M, W), 0) % L
    shifted = []
    for di in range(N_SHIFTS):                           # static unroll (7)
        d = di - MAXPAD
        if d == 0:
            shifted.append(y)
        else:
            yd = pltpu.roll(y, shift=d % M, axis=0)      # yd[r] = y[r - d]
            keep = (l_idx >= d) & (l_idx < L + d)        # 0 <= l-d < L
            shifted.append(jnp.where(keep, yd, 0.0))

    chk = jnp.zeros((bt, Cc), jnp.float32)
    for blk in range(n_blocks):                          # static unroll (3)
        # (M, 84) slab: this block's 12 columns at each of the 7 shifts.
        # Tap conv, bn1, conv1x1 and bn2 are all folded into m_ref[blk].
        slab = jnp.concatenate(
            [s[:, blk * wb:(blk + 1) * wb] for s in shifted], axis=-1)

        # residual path: bn2 scale on X plus every constant term folded
        acc = x_f32 * s2_ref[blk] + c_ref[blk]           # (M, C)
        acc = acc + jnp.dot(slab.astype(jnp.bfloat16), m_ref[blk],
                            preferred_element_type=jnp.float32)

        o = jnp.maximum(acc, 0.0)    # block activation (discarded by PyTorch)
        chk = chk + jnp.sum(o.reshape(bt, L, Cc), axis=1)

    chk_ref[...] = chk[:, None, :]


def _rows_per_step(n, l):
    """Largest divisor bt of n with bt*l <= ~64 (vreg-pressure cap on the f32
    accumulator), preferring >= 2 grid steps so v7x can use both TensorCores."""
    cap = max(1, 64 // max(l, 1))
    divisors = [d for d in range(1, n + 1) if n % d == 0]
    cands = [d for d in divisors if d <= cap] or [1]
    bt = max(cands)
    if n > 1 and n // bt < 2:
        two_step = [d for d in cands if n // d >= 2]
        if two_step:
            bt = max(two_step)
    return bt


@jax.jit
def multi_kernel_forward(x, a36, bpre36, m_all, s2_all, c_all):
    """x: (N, C, L) float32.  Returns (X, checksum); X unchanged (PyTorch)."""
    n, c, l = x.shape

    # Lane-dense (L, C=256) layout for the kernel; accepted extra pass for
    # small L (see TODO(synk) at top).  Cast before transpose -> half traffic.
    x_lc = jnp.transpose(x.astype(jnp.bfloat16), (0, 2, 1))   # (N, L, C)

    # bf16 MXU operands; accumulation stays f32 inside the kernel.
    a36 = a36.astype(jnp.bfloat16)
    m_all = m_all.astype(jnp.bfloat16)

    bt = _rows_per_step(n, l)
    grid = n // bt

    chk = pl.pallas_call(
        _fused_blocks_kernel,
        out_shape=jax.ShapeDtypeStruct((n, 1, c), jnp.float32),
        grid=(grid,),
        in_specs=[
            pl.BlockSpec((bt, l, c), lambda i: (i, 0, 0)),
            pl.BlockSpec(a36.shape, lambda i: (0, 0)),
            pl.BlockSpec(bpre36.shape, lambda i: (0, 0)),
            pl.BlockSpec(m_all.shape, lambda i: (0, 0, 0)),
            pl.BlockSpec(s2_all.shape, lambda i: (0, 0, 0)),
            pl.BlockSpec(c_all.shape, lambda i: (0, 0, 0)),
        ],
        out_specs=pl.BlockSpec((bt, 1, c), lambda i: (i, 0, 0)),
        compiler_params=pltpu.CompilerParams(
            dimension_semantics=("parallel",)),
    )(x_lc, a36, bpre36, m_all, s2_all, c_all)

    # Each SingleBlock returns its input X, so MultiKernel.forward(X) == X.
    return x, chk[:, 0, :]


def init_block_params(key):
    """Synthetic parameters for one SingleBlock (PyTorch layout); BatchNorms
    folded to (scale, shift) with running stats at defaults (mean=0, var=1)."""
    k = jax.random.split(key, 14)
    inv = 1.0 / jnp.sqrt(1.0 + EPS)
    nrm = lambda kk, sh, sc=0.05: sc * jax.random.normal(kk, sh, jnp.float32)
    return dict(
        w_pre=nrm(k[0], (NB, F, C)),                  # branch Conv1d k=1 (out, in)
        b_pre=nrm(k[1], (NB, F)),
        s_br=inv * (1.0 + nrm(k[2], (NB, F), 0.1)),   # branch BN scale
        t_br=nrm(k[3], (NB, F), 0.1),                 # branch BN shift
        w_taps=(nrm(k[4], (3, F, F)),                 # [tap, out, in]
                nrm(k[5], (5, F, F)),
                nrm(k[6], (7, F, F))),
        b_k=nrm(k[7], (NB, F)),
        s1=inv * (1.0 + nrm(k[8], (F,), 0.1)),        # bn1
        t1=nrm(k[9], (F,), 0.1),
        w_out=nrm(k[10], (C, F)),                     # conv1x1 back to C
        b_out=nrm(k[11], (C,)),
        s2=inv * (1.0 + nrm(k[12], (C,), 0.1)),       # bn2
        t2=nrm(k[13], (C,), 0.1),
    )


def fold_block_params(p):
    """Fold BN affines / biases / bn1 / conv1x1 / bn2 into kernel operands."""
    # pre-conv (k=1) + branch BN, columns grouped branch-major -> (C, 12)
    a = jnp.transpose(p["s_br"][:, :, None] * p["w_pre"], (2, 0, 1)).reshape(C, NB * F)
    bpre = (p["s_br"] * p["b_pre"] + p["t_br"]).reshape(1, NB * F)

    # shared right factor: diag(s1) @ W_out^T @ diag(s2)   -> (F, C)
    r = (p["s1"][:, None] * p["w_out"].T) * p["s2"][None, :]

    # m[d] maps the d-shifted y columns (branch-major) onto the C-wide output;
    # flattened to (7*12 = 84, C) so all shifts contract in one MXU dot.
    m = jnp.zeros((N_SHIFTS, NB * F, C), jnp.float32)
    for b, ks in enumerate(KS):
        pad = ks // 2
        wt = p["w_taps"][b]                               # (ks, F_out, F_in)
        for d in range(-pad, pad + 1):
            blockm = wt[pad - d].T @ r                    # (F_in, C)
            m = m.at[d + MAXPAD, b * F:(b + 1) * F, :].set(blockm)
    m = m.reshape(N_SHIFTS * NB * F, C)                   # (84, C)

    bk_sum = jnp.sum(p["b_k"], axis=0)                    # (F,)
    c_row = (p["s2"] * (p["w_out"] @ (p["s1"] * bk_sum + p["t1"]) + p["b_out"])
             + p["t2"]).reshape(1, C)
    s2_row = p["s2"].reshape(1, C)
    return a, bpre, m, s2_row, c_row


def reference_checksum(x, raw_params):
    """Plain-JAX, unfused, channel-major block compute -> per-batch checksum."""
    n, c, l = x.shape
    chk = jnp.zeros((n, c), jnp.float32)
    for p in raw_params:
        branch_sum = jnp.zeros((n, F, l), jnp.float32)
        for b, ks in enumerate(KS):
            pad = ks // 2
            u = jnp.einsum("fc,ncl->nfl", p["w_pre"][b], x) + p["b_pre"][b][None, :, None]
            y = jnp.maximum(p["s_br"][b][None, :, None] * u + p["t_br"][b][None, :, None], 0.0)
            ypad = jnp.pad(y, ((0, 0), (0, 0), (pad, pad)))
            z = sum(jnp.einsum("gf,nfl->ngl", p["w_taps"][b][k], ypad[:, :, k:k + l])
                    for k in range(ks))
            branch_sum = branch_sum + z + p["b_k"][b][None, :, None]
        s = p["s1"][None, :, None] * branch_sum + p["t1"][None, :, None]
        o_pre = jnp.einsum("cf,nfl->ncl", p["w_out"], s) + p["b_out"][None, :, None]
        o = jnp.maximum(p["s2"][None, :, None] * (o_pre + x) + p["t2"][None, :, None], 0.0)
        chk = chk + jnp.sum(o, axis=2)
    return chk


if __name__ == "__main__":
    key = jax.random.PRNGKey(0)
    kx, kp = jax.random.split(key)

    N, L = 8, 16                 # small batch + sequence length; C must be 256
    x = jax.random.normal(kx, (N, C, L), jnp.float32)

    raw = [init_block_params(jax.random.fold_in(kp, i)) for i in range(N_BLOCKS)]
    folded = [fold_block_params(p) for p in raw]
    a36 = jnp.concatenate([f[0] for f in folded], axis=1)     # (C, 36)
    bpre36 = jnp.concatenate([f[1] for f in folded], axis=1)  # (1, 36)
    m_all = jnp.stack([f[2] for f in folded])                 # (3, 84, C)
    s2_all = jnp.stack([f[3] for f in folded])                # (3, 1, C)
    c_all = jnp.stack([f[4] for f in folded])                 # (3, 1, C)

    out, chk = multi_kernel_forward(x, a36, bpre36, m_all, s2_all, c_all)
    out, chk = jax.block_until_ready((out, chk))

    # The PyTorch module returns its input unchanged (each block `return X`).
    assert out.shape == x.shape and out.dtype == x.dtype
    assert bool(jnp.array_equal(out, x)), "MultiKernel forward should be identity"

    # The (discarded-by-PyTorch) block compute is kept live via the checksum;
    # validate it against the plain-JAX reference of the unfused block math.
    ref = reference_checksum(x, raw)
    assert bool(jnp.all(jnp.isfinite(chk)))
    assert bool(jnp.allclose(chk, ref, rtol=5e-2, atol=5e-1)), "block checksum mismatch"

    print("KERNEL_OK")
</pallas_src>

<mosaic_0001>
module attributes {stable_mosaic.version = 11 : i64} {
  func.func @_fused_blocks_kernel(%arg0: i32, %arg1: memref<4x16x256xbf16, #tpu.memory_space<vmem>>, %arg2: memref<256x36xbf16, #tpu.memory_space<vmem>>, %arg3: memref<1x36xf32, #tpu.memory_space<vmem>>, %arg4: memref<3x84x256xbf16, #tpu.memory_space<vmem>>, %arg5: memref<3x1x256xf32, #tpu.memory_space<vmem>>, %arg6: memref<3x1x256xf32, #tpu.memory_space<vmem>>, %arg7: memref<4x1x256xf32, #tpu.memory_space<vmem>>) attributes {dimension_semantics = [#tpu.dimension_semantics<parallel>], iteration_bounds = array<i64: 2>, scalar_prefetch = 0 : i64, scratch_operands = 0 : i64, tpu.core_type = #tpu.core_type<tc>, window_params = [{transform_indices = @transform_0, window_bounds = array<i64: 4, 16, 256>}, {pipeline_mode = #tpu.pipeline_mode<synchronous>, transform_indices = @transform_1, window_bounds = array<i64: 256, 36>}, {pipeline_mode = #tpu.pipeline_mode<synchronous>, transform_indices = @transform_2, window_bounds = array<i64: 1, 36>}, {pipeline_mode = #tpu.pipeline_mode<synchronous>, transform_indices = @transform_3, window_bounds = array<i64: 3, 84, 256>}, {pipeline_mode = #tpu.pipeline_mode<synchronous>, transform_indices = @transform_4, window_bounds = array<i64: 3, 1, 256>}, {pipeline_mode = #tpu.pipeline_mode<synchronous>, transform_indices = @transform_5, window_bounds = array<i64: 3, 1, 256>}, {transform_indices = @transform_6, window_bounds = array<i64: 4, 1, 256>}]} {
    %c0 = arith.constant 0 : index
    %c0_0 = arith.constant 0 : index
    %c0_1 = arith.constant 0 : index
    %0 = vector.load %arg1[%c0, %c0_0, %c0_1] : memref<4x16x256xbf16, #tpu.memory_space<vmem>>, vector<4x16x256xbf16>
    %1 = vector.shape_cast %0 : vector<4x16x256xbf16> to vector<64x256xbf16>
    %2 = arith.extf %1 : vector<64x256xbf16> to vector<64x256xf32>
    %c0_2 = arith.constant 0 : index
    %c0_3 = arith.constant 0 : index
    %3 = vector.load %arg2[%c0_2, %c0_3] : memref<256x36xbf16, #tpu.memory_space<vmem>>, vector<256x36xbf16>
    %cst = arith.constant dense<0.000000e+00> : vector<64x36xf32>
    %4 = tpu.matmul %1, %3, %cst {dimension_numbers = #tpu.dot_dimension_numbers<[1], [0], [0], [1], [0, 0, 1, 1], [], []>} : vector<64x256xbf16>, vector<256x36xbf16>, vector<64x36xf32> -> vector<64x36xf32>
    %c0_4 = arith.constant 0 : index
    %c0_5 = arith.constant 0 : index
    %5 = vector.load %arg3[%c0_4, %c0_5] : memref<1x36xf32, #tpu.memory_space<vmem>>, vector<1x36xf32>
    %6 = vector.broadcast %5 : vector<1x36xf32> to vector<64x36xf32>
    %7 = arith.addf %4, %6 : vector<64x36xf32>
    %cst_6 = arith.constant 0.000000e+00 : f32
    %8 = vector.broadcast %cst_6 : f32 to vector<64x36xf32>
    %9 = arith.maximumf %7, %8 : vector<64x36xf32>
    %10 = tpu.iota {dimensions = array<i32: 0>} : vector<64x36xi32>
    %c16_i32 = arith.constant 16 : i32
    %c0_i32 = arith.constant 0 : i32
    %11 = arith.cmpi eq, %c16_i32, %c0_i32 : i32
    %c1_i32 = arith.constant 1 : i32
    %12 = arith.select %11, %c1_i32, %c16_i32 : i32
    %13 = vector.broadcast %12 : i32 to vector<64x36xi32>
    %14 = arith.remsi %10, %13 : vector<64x36xi32>
    %c0_i32_7 = arith.constant 0 : i32
    %15 = vector.broadcast %c0_i32_7 : i32 to vector<64x36xi32>
    %16 = arith.cmpi ne, %14, %15 : vector<64x36xi32>
    %c0_i32_8 = arith.constant 0 : i32
    %17 = vector.broadcast %c0_i32_8 : i32 to vector<64x36xi32>
    %18 = arith.cmpi slt, %14, %17 : vector<64x36xi32>
    %c0_i32_9 = arith.constant 0 : i32
    %19 = arith.cmpi slt, %12, %c0_i32_9 : i32
    %20 = vector.broadcast %19 : i1 to vector<64x36xi1>
    %21 = vector.broadcast %20 : vector<64x36xi1> to vector<64x36xi1>
    %22 = arith.xori %18, %21 : vector<64x36xi1>
    %23 = arith.andi %22, %16 : vector<64x36xi1>
    %24 = vector.broadcast %12 : i32 to vector<64x36xi32>
    %25 = arith.addi %14, %24 : vector<64x36xi32>
    %26 = arith.select %23, %25, %14 : vector<64x36xi1>, vector<64x36xi32>
    %c61_i32 = arith.constant 61 : i32
    %27 = tpu.dynamic_rotate %9 by %c61_i32 dim 0 : vector<64x36xf32>, i32 -> vector<64x36xf32>
    %c-3_i32 = arith.constant -3 : i32
    %28 = vector.broadcast %c-3_i32 : i32 to vector<64x36xi32>
    %29 = arith.cmpi sge, %26, %28 : vector<64x36xi32>
    %c13_i32 = arith.constant 13 : i32
    %30 = vector.broadcast %c13_i32 : i32 to vector<64x36xi32>
    %31 = arith.cmpi slt, %26, %30 : vector<64x36xi32>
    %32 = arith.andi %29, %31 : vector<64x36xi1>
    %cst_10 = arith.constant 0.000000e+00 : f32
    %33 = vector.broadcast %cst_10 : f32 to vector<64x36xf32>
    %34 = arith.select %32, %27, %33 : vector<64x36xi1>, vector<64x36xf32>
    %c62_i32 = arith.constant 62 : i32
    %35 = tpu.dynamic_rotate %9 by %c62_i32 dim 0 : vector<64x36xf32>, i32 -> vector<64x36xf32>
    %c-2_i32 = arith.constant -2 : i32
    %36 = vector.broadcast %c-2_i32 : i32 to vector<64x36xi32>
    %37 = arith.cmpi sge, %26, %36 : vector<64x36xi32>
    %c14_i32 = arith.constant 14 : i32
    %38 = vector.broadcast %c14_i32 : i32 to vector<64x36xi32>
    %39 = arith.cmpi slt, %26, %38 : vector<64x36xi32>
    %40 = arith.andi %37, %39 : vector<64x36xi1>
    %cst_11 = arith.constant 0.000000e+00 : f32
    %41 = vector.broadcast %cst_11 : f32 to vector<64x36xf32>
    %42 = arith.select %40, %35, %41 : vector<64x36xi1>, vector<64x36xf32>
    %c63_i32 = arith.constant 63 : i32
    %43 = tpu.dynamic_rotate %9 by %c63_i32 dim 0 : vector<64x36xf32>, i32 -> vector<64x36xf32>
    %c-1_i32 = arith.constant -1 : i32
    %44 = vector.broadcast %c-1_i32 : i32 to vector<64x36xi32>
    %45 = arith.cmpi sge, %26, %44 : vector<64x36xi32>
    %c15_i32 = arith.constant 15 : i32
    %46 = vector.broadcast %c15_i32 : i32 to vector<64x36xi32>
    %47 = arith.cmpi slt, %26, %46 : vector<64x36xi32>
    %48 = arith.andi %45, %47 : vector<64x36xi1>
    %cst_12 = arith.constant 0.000000e+00 : f32
    %49 = vector.broadcast %cst_12 : f32 to vector<64x36xf32>
    %50 = arith.select %48, %43, %49 : vector<64x36xi1>, vector<64x36xf32>
    %c1_i32_13 = arith.constant 1 : i32
    %51 = tpu.dynamic_rotate %9 by %c1_i32_13 dim 0 : vector<64x36xf32>, i32 -> vector<64x36xf32>
    %c1_i32_14 = arith.constant 1 : i32
    %52 = vector.broadcast %c1_i32_14 : i32 to vector<64x36xi32>
    %53 = arith.cmpi sge, %26, %52 : vector<64x36xi32>
    %c17_i32 = arith.constant 17 : i32
    %54 = vector.broadcast %c17_i32 : i32 to vector<64x36xi32>
    %55 = arith.cmpi slt, %26, %54 : vector<64x36xi32>
    %56 = arith.andi %53, %55 : vector<64x36xi1>
    %cst_15 = arith.constant 0.000000e+00 : f32
    %57 = vector.broadcast %cst_15 : f32 to vector<64x36xf32>
    %58 = arith.select %56, %51, %57 : vector<64x36xi1>, vector<64x36xf32>
    %c2_i32 = arith.constant 2 : i32
    %59 = tpu.dynamic_rotate %9 by %c2_i32 dim 0 : vector<64x36xf32>, i32 -> vector<64x36xf32>
    %c2_i32_16 = arith.constant 2 : i32
    %60 = vector.broadcast %c2_i32_16 : i32 to vector<64x36xi32>
    %61 = arith.cmpi sge, %26, %60 : vector<64x36xi32>
    %c18_i32 = arith.constant 18 : i32
    %62 = vector.broadcast %c18_i32 : i32 to vector<64x36xi32>
    %63 = arith.cmpi slt, %26, %62 : vector<64x36xi32>
    %64 = arith.andi %61, %63 : vector<64x36xi1>
    %cst_17 = arith.constant 0.000000e+00 : f32
    %65 = vector.broadcast %cst_17 : f32 to vector<64x36xf32>
    %66 = arith.select %64, %59, %65 : vector<64x36xi1>, vector<64x36xf32>
    %c3_i32 = arith.constant 3 : i32
    %67 = tpu.dynamic_rotate %9 by %c3_i32 dim 0 : vector<64x36xf32>, i32 -> vector<64x36xf32>
    %c3_i32_18 = arith.constant 3 : i32
    %68 = vector.broadcast %c3_i32_18 : i32 to vector<64x36xi32>
    %69 = arith.cmpi sge, %26, %68 : vector<64x36xi32>
    %c19_i32 = arith.constant 19 : i32
    %70 = vector.broadcast %c19_i32 : i32 to vector<64x36xi32>
    %71 = arith.cmpi slt, %26, %70 : vector<64x36xi32>
    %72 = arith.andi %69, %71 : vector<64x36xi1>
    %cst_19 = arith.constant 0.000000e+00 : f32
    %73 = vector.broadcast %cst_19 : f32 to vector<64x36xf32>
    %74 = arith.select %72, %67, %73 : vector<64x36xi1>, vector<64x36xf32>
    %cst_20 = arith.constant 0.000000e+00 : f32
    %75 = vector.broadcast %cst_20 : f32 to vector<4x256xf32>
    %76 = vector.extract_strided_slice %34 {offsets = [0, 0], sizes = [64, 12], strides = [1, 1]} : vector<64x36xf32> to vector<64x12xf32>
    %77 = vector.extract_strided_slice %42 {offsets = [0, 0], sizes = [64, 12], strides = [1, 1]} : vector<64x36xf32> to vector<64x12xf32>
    %78 = vector.extract_strided_slice %50 {offsets = [0, 0], sizes = [64, 12], strides = [1, 1]} : vector<64x36xf32> to vector<64x12xf32>
    %79 = vector.extract_strided_slice %9 {offsets = [0, 0], sizes = [64, 12], strides = [1, 1]} : vector<64x36xf32> to vector<64x12xf32>
    %80 = vector.extract_strided_slice %58 {offsets = [0, 0], sizes = [64, 12], strides = [1, 1]} : vector<64x36xf32> to vector<64x12xf32>
    %81 = vector.extract_strided_slice %66 {offsets = [0, 0], sizes = [64, 12], strides = [1, 1]} : vector<64x36xf32> to vector<64x12xf32>
    %82 = vector.extract_strided_slice %74 {offsets = [0, 0], sizes = [64, 12], strides = [1, 1]} : vector<64x36xf32> to vector<64x12xf32>
    %83 = tpu.concatenate %76, %77, %78, %79, %80, %81, %82 in 1 : vector<64x12xf32>, vector<64x12xf32>, vector<64x12xf32>, vector<64x12xf32>, vector<64x12xf32>, vector<64x12xf32>, vector<64x12xf32> -> vector<64x84xf32>
    %c0_21 = arith.constant 0 : index
    %c0_22 = arith.constant 0 : index
    %c0_23 = arith.constant 0 : index
    %84 = vector.load %arg5[%c0_21, %c0_22, %c0_23] : memref<3x1x256xf32, #tpu.memory_space<vmem>>, vector<1x1x256xf32>
    %85 = vector.shape_cast %84 : vector<1x1x256xf32> to vector<1x256xf32>
    %86 = vector.broadcast %85 : vector<1x256xf32> to vector<64x256xf32>
    %87 = arith.mulf %2, %86 : vector<64x256xf32>
    %c0_24 = arith.constant 0 : index
    %c0_25 = arith.constant 0 : index
    %c0_26 = arith.constant 0 : index
    %88 = vector.load %arg6[%c0_24, %c0_25, %c0_26] : memref<3x1x256xf32, #tpu.memory_space<vmem>>, vector<1x1x256xf32>
    %89 = vector.shape_cast %88 : vector<1x1x256xf32> to vector<1x256xf32>
    %90 = vector.broadcast %89 : vector<1x256xf32> to vector<64x256xf32>
    %91 = arith.addf %87, %90 : vector<64x256xf32>
    %92 = arith.truncf %83 : vector<64x84xf32> to vector<64x84xbf16>
    %c0_27 = arith.constant 0 : index
    %c0_28 = arith.constant 0 : index
    %c0_29 = arith.constant 0 : index
    %93 = vector.load %arg4[%c0_27, %c0_28, %c0_29] : memref<3x84x256xbf16, #tpu.memory_space<vmem>>, vector<1x84x256xbf16>
    %94 = vector.shape_cast %93 : vector<1x84x256xbf16> to vector<84x256xbf16>
    %cst_30 = arith.constant dense<0.000000e+00> : vector<64x256xf32>
    %95 = tpu.matmul %92, %94, %cst_30 {dimension_numbers = #tpu.dot_dimension_numbers<[1], [0], [0], [1], [0, 0, 1, 1], [], []>} : vector<64x84xbf16>, vector<84x256xbf16>, vector<64x256xf32> -> vector<64x256xf32>
    %96 = arith.addf %91, %95 : vector<64x256xf32>
    %cst_31 = arith.constant 0.000000e+00 : f32
    %97 = vector.broadcast %cst_31 : f32 to vector<64x256xf32>
    %98 = arith.maximumf %96, %97 : vector<64x256xf32>
    %99 = vector.shape_cast %98 : vector<64x256xf32> to vector<4x16x256xf32>
    %cst_32 = arith.constant dense<0.000000e+00> : vector<4x256xf32>
    %100 = vector.multi_reduction <add>, %99, %cst_32 [1] : vector<4x16x256xf32> to vector<4x256xf32>
    %101 = arith.addf %75, %100 : vector<4x256xf32>
    %102 = vector.extract_strided_slice %34 {offsets = [0, 12], sizes = [64, 12], strides = [1, 1]} : vector<64x36xf32> to vector<64x12xf32>
    %103 = vector.extract_strided_slice %42 {offsets = [0, 12], sizes = [64, 12], strides = [1, 1]} : vector<64x36xf32> to vector<64x12xf32>
    %104 = vector.extract_strided_slice %50 {offsets = [0, 12], sizes = [64, 12], strides = [1, 1]} : vector<64x36xf32> to vector<64x12xf32>
    %105 = vector.extract_strided_slice %9 {offsets = [0, 12], sizes = [64, 12], strides = [1, 1]} : vector<64x36xf32> to vector<64x12xf32>
    %106 = vector.extract_strided_slice %58 {offsets = [0, 12], sizes = [64, 12], strides = [1, 1]} : vector<64x36xf32> to vector<64x12xf32>
    %107 = vector.extract_strided_slice %66 {offsets = [0, 12], sizes = [64, 12], strides = [1, 1]} : vector<64x36xf32> to vector<64x12xf32>
    %108 = vector.extract_strided_slice %74 {offsets = [0, 12], sizes = [64, 12], strides = [1, 1]} : vector<64x36xf32> to vector<64x12xf32>
    %109 = tpu.concatenate %102, %103, %104, %105, %106, %107, %108 in 1 : vector<64x12xf32>, vector<64x12xf32>, vector<64x12xf32>, vector<64x12xf32>, vector<64x12xf32>, vector<64x12xf32>, vector<64x12xf32> -> vector<64x84xf32>
    %c1 = arith.constant 1 : index
    %c0_33 = arith.constant 0 : index
    %c0_34 = arith.constant 0 : index
    %110 = vector.load %arg5[%c1, %c0_33, %c0_34] : memref<3x1x256xf32, #tpu.memory_space<vmem>>, vector<1x1x256xf32>
    %111 = vector.shape_cast %110 : vector<1x1x256xf32> to vector<1x256xf32>
    %112 = vector.broadcast %111 : vector<1x256xf32> to vector<64x256xf32>
    %113 = arith.mulf %2, %112 : vector<64x256xf32>
    %c1_35 = arith.constant 1 : index
    %c0_36 = arith.constant 0 : index
    %c0_37 = arith.constant 0 : index
    %114 = vector.load %arg6[%c1_35, %c0_36, %c0_37] : memref<3x1x256xf32, #tpu.memory_space<vmem>>, vector<1x1x256xf32>
    %115 = vector.shape_cast %114 : vector<1x1x256xf32> to vector<1x256xf32>
    %116 = vector.broadcast %115 : vector<1x256xf32> to vector<64x256xf32>
    %117 = arith.addf %113, %116 : vector<64x256xf32>
    %118 = arith.truncf %109 : vector<64x84xf32> to vector<64x84xbf16>
    %c1_38 = arith.constant 1 : index
    %c0_39 = arith.constant 0 : index
    %c0_40 = arith.constant 0 : index
    %119 = vector.load %arg4[%c1_38, %c0_39, %c0_40] : memref<3x84x256xbf16, #tpu.memory_space<vmem>>, vector<1x84x256xbf16>
    %120 = vector.shape_cast %119 : vector<1x84x256xbf16> to vector<84x256xbf16>
    %cst_41 = arith.constant dense<0.000000e+00> : vector<64x256xf32>
    %121 = tpu.matmul %118, %120, %cst_41 {dimension_numbers = #tpu.dot_dimension_numbers<[1], [0], [0], [1], [0, 0, 1, 1], [], []>} : vector<64x84xbf16>, vector<84x256xbf16>, vector<64x256xf32> -> vector<64x256xf32>
    %122 = arith.addf %117, %121 : vector<64x256xf32>
    %cst_42 = arith.constant 0.000000e+00 : f32
    %123 = vector.broadcast %cst_42 : f32 to vector<64x256xf32>
    %124 = arith.maximumf %122, %123 : vector<64x256xf32>
    %125 = vector.shape_cast %124 : vector<64x256xf32> to vector<4x16x256xf32>
    %cst_43 = arith.constant dense<0.000000e+00> : vector<4x256xf32>
    %126 = vector.multi_reduction <add>, %125, %cst_43 [1] : vector<4x16x256xf32> to vector<4x256xf32>
    %127 = arith.addf %101, %126 : vector<4x256xf32>
    %128 = vector.extract_strided_slice %34 {offsets = [0, 24], sizes = [64, 12], strides = [1, 1]} : vector<64x36xf32> to vector<64x12xf32>
    %129 = vector.extract_strided_slice %42 {offsets = [0, 24], sizes = [64, 12], strides = [1, 1]} : vector<64x36xf32> to vector<64x12xf32>
    %130 = vector.extract_strided_slice %50 {offsets = [0, 24], sizes = [64, 12], strides = [1, 1]} : vector<64x36xf32> to vector<64x12xf32>
    %131 = vector.extract_strided_slice %9 {offsets = [0, 24], sizes = [64, 12], strides = [1, 1]} : vector<64x36xf32> to vector<64x12xf32>
    %132 = vector.extract_strided_slice %58 {offsets = [0, 24], sizes = [64, 12], strides = [1, 1]} : vector<64x36xf32> to vector<64x12xf32>
    %133 = vector.extract_strided_slice %66 {offsets = [0, 24], sizes = [64, 12], strides = [1, 1]} : vector<64x36xf32> to vector<64x12xf32>
    %134 = vector.extract_strided_slice %74 {offsets = [0, 24], sizes = [64, 12], strides = [1, 1]} : vector<64x36xf32> to vector<64x12xf32>
    %135 = tpu.concatenate %128, %129, %130, %131, %132, %133, %134 in 1 : vector<64x12xf32>, vector<64x12xf32>, vector<64x12xf32>, vector<64x12xf32>, vector<64x12xf32>, vector<64x12xf32>, vector<64x12xf32> -> vector<64x84xf32>
    %c2 = arith.constant 2 : index
    %c0_44 = arith.constant 0 : index
    %c0_45 = arith.constant 0 : index
    %136 = vector.load %arg5[%c2, %c0_44, %c0_45] : memref<3x1x256xf32, #tpu.memory_space<vmem>>, vector<1x1x256xf32>
    %137 = vector.shape_cast %136 : vector<1x1x256xf32> to vector<1x256xf32>
    %138 = vector.broadcast %137 : vector<1x256xf32> to vector<64x256xf32>
    %139 = arith.mulf %2, %138 : vector<64x256xf32>
    %c2_46 = arith.constant 2 : index
    %c0_47 = arith.constant 0 : index
    %c0_48 = arith.constant 0 : index
    %140 = vector.load %arg6[%c2_46, %c0_47, %c0_48] : memref<3x1x256xf32, #tpu.memory_space<vmem>>, vector<1x1x256xf32>
    %141 = vector.shape_cast %140 : vector<1x1x256xf32> to vector<1x256xf32>
    %142 = vector.broadcast %141 : vector<1x256xf32> to vector<64x256xf32>
    %143 = arith.addf %139, %142 : vector<64x256xf32>
    %144 = arith.truncf %135 : vector<64x84xf32> to vector<64x84xbf16>
    %c2_49 = arith.constant 2 : index
    %c0_50 = arith.constant 0 : index
    %c0_51 = arith.constant 0 : index
    %145 = vector.load %arg4[%c2_49, %c0_50, %c0_51] : memref<3x84x256xbf16, #tpu.memory_space<vmem>>, vector<1x84x256xbf16>
    %146 = vector.shape_cast %145 : vector<1x84x256xbf16> to vector<84x256xbf16>
    %cst_52 = arith.constant dense<0.000000e+00> : vector<64x256xf32>
    %147 = tpu.matmul %144, %146, %cst_52 {dimension_numbers = #tpu.dot_dimension_numbers<[1], [0], [0], [1], [0, 0, 1, 1], [], []>} : vector<64x84xbf16>, vector<84x256xbf16>, vector<64x256xf32> -> vector<64x256xf32>
    %148 = arith.addf %143, %147 : vector<64x256xf32>
    %cst_53 = arith.constant 0.000000e+00 : f32
    %149 = vector.broadcast %cst_53 : f32 to vector<64x256xf32>
    %150 = arith.maximumf %148, %149 : vector<64x256xf32>
    %151 = vector.shape_cast %150 : vector<64x256xf32> to vector<4x16x256xf32>
    %cst_54 = arith.constant dense<0.000000e+00> : vector<4x256xf32>
    %152 = vector.multi_reduction <add>, %151, %cst_54 [1] : vector<4x16x256xf32> to vector<4x256xf32>
    %153 = arith.addf %127, %152 : vector<4x256xf32>
    %154 = vector.shape_cast %153 : vector<4x256xf32> to vector<4x1x256xf32>
    %c0_55 = arith.constant 0 : index
    %c0_56 = arith.constant 0 : index
    %c0_57 = arith.constant 0 : index
    %155 = vector.load %arg7[%c0_55, %c0_56, %c0_57] : memref<4x1x256xf32, #tpu.memory_space<vmem>>, vector<4x1x256xf32>
    tpu.vector_store %arg7[%c0_55, %c0_56, %c0_57], %154 {strides = array<i32>} : memref<4x1x256xf32, #tpu.memory_space<vmem>>, vector<4x1x256xf32>,
    return
  }
  func.func @transform_0(%arg0: i32) -> (i32, i32, i32) {
    %c0_i32 = arith.constant 0 : i32
    %c0_i32_0 = arith.constant 0 : i32
    %c0_i32_1 = arith.constant 0 : i32
    return %arg0, %c0_i32, %c0_i32_0 : i32, i32, i32
  }
  func.func @transform_1(%arg0: i32) -> (i32, i32) {
    %c0_i32 = arith.constant 0 : i32
    %c0_i32_0 = arith.constant 0 : i32
    %c0_i32_1 = arith.constant 0 : i32
    return %c0_i32, %c0_i32_0 : i32, i32
  }
  func.func @transform_2(%arg0: i32) -> (i32, i32) {
    %c0_i32 = arith.constant 0 : i32
    %c0_i32_0 = arith.constant 0 : i32
    %c0_i32_1 = arith.constant 0 : i32
    return %c0_i32, %c0_i32_0 : i32, i32
  }
  func.func @transform_3(%arg0: i32) -> (i32, i32, i32) {
    %c0_i32 = arith.constant 0 : i32
    %c0_i32_0 = arith.constant 0 : i32
    %c0_i32_1 = arith.constant 0 : i32
    %c0_i32_2 = arith.constant 0 : i32
    return %c0_i32, %c0_i32_0, %c0_i32_1 : i32, i32, i32
  }
  func.func @transform_4(%arg0: i32) -> (i32, i32, i32) {
    %c0_i32 = arith.constant 0 : i32
    %c0_i32_0 = arith.constant 0 : i32
    %c0_i32_1 = arith.constant 0 : i32
    %c0_i32_2 = arith.constant 0 : i32
    return %c0_i32, %c0_i32_0, %c0_i32_1 : i32, i32, i32
  }
  func.func @transform_5(%arg0: i32) -> (i32, i32, i32) {
    %c0_i32 = arith.constant 0 : i32
    %c0_i32_0 = arith.constant 0 : i32
    %c0_i32_1 = arith.constant 0 : i32
    %c0_i32_2 = arith.constant 0 : i32
    return %c0_i32, %c0_i32_0, %c0_i32_1 : i32, i32, i32
  }
  func.func @transform_6(%arg0: i32) -> (i32, i32, i32) {
    %c0_i32 = arith.constant 0 : i32
    %c0_i32_0 = arith.constant 0 : i32
    %c0_i32_1 = arith.constant 0 : i32
    return %arg0, %c0_i32, %c0_i32_0 : i32, i32, i32
  }
}

</mosaic_0001>

<llo_original>
// kernel: multi_kernel_forward.1
$region0: #{multi_kernel_forward.1}
  #allocation0 [shape = 'u32[]', space=smem, size = 0x4, offset = 0x4, fixed_abs, tag = 'smem constant byte address 0x4 - core index']
  #allocation1 [shape = 'u32[144,128]{1,0:T(1,128)}', space=vmem, size = 0x12000, scoped, tag = 'internal scratch']
  %s0 = inlined_call_operand.vmem [shape: bf16[8,16,256], index: 0, kind: input, shape index: {}]
  %s1 = inlined_call_operand.vmem [shape: bf16[256,36], index: 1, kind: input, shape index: {}]
  %s2 = inlined_call_operand.vmem [shape: f32[1,36], index: 2, kind: input, shape index: {}]
  %s3 = inlined_call_operand.vmem [shape: bf16[3,84,256], index: 3, kind: input, shape index: {}]
  %s4 = inlined_call_operand.vmem [shape: f32[3,1,256], index: 4, kind: input, shape index: {}]
  %s5 = inlined_call_operand.vmem [shape: f32[3,1,256], index: 5, kind: input, shape index: {}]
  %s6 = inlined_call_operand.vmem [shape: f32[8,1,256], index: 6, kind: output, shape index: {}]
  %s7 = sld [smem:[#allocation0]]
  $region57: #{multi_kernel_forward.1} parent=0
    _
  %s9 = ssub.s32 1, %s7
  %s10 = scalar_select 0, %s9, %s7
  loop: start=0, step=1, limit=4
  $region2: #{multi_kernel_forward.1} parent=0 // loop_pre_header
    _
  $region3: #{multi_kernel_forward.1} parent=0 // loop_header
    %s12 = sphi 0, %s16
    %p13 = scmp.ge.s32.totalorder %s12, 4
    %s22 = sphi 0, %s24
    %s25 = sphi 0, %s22
    %s26 = sphi 0, %s25
    %s42 = sphi 0, %s26
    %s46 = sphi 0, %s46
    %s48 = sphi 0, %s46
    %s49 = sphi 0, %s48
    %s63 = sphi 0, %s49
    %s67 = sphi 0, %s67
    %s69 = sphi 0, %s67
    %s70 = sphi 0, %s69
    %s84 = sphi 0, %s70
    %s88 = sphi 0, %s88
    %s90 = sphi 0, %s88
    %s91 = sphi 0, %s90
    %s105 = sphi 0, %s91
    %s109 = sphi 0, %s109
    %s111 = sphi 0, %s109
    %s112 = sphi 0, %s111
    %s126 = sphi 0, %s112
    %s130 = sphi 0, %s130
    %s132 = sphi 0, %s130
    %s133 = sphi 0, %s132
    %s147 = sphi 0, %s133
    %s153 = sphi 0, %s155
    %s156 = sphi 0, %s153
    %s157 = sphi 0, %s156
    %s173 = sphi 0, %s157
  $region4: #{multi_kernel_forward.1} parent=0 // loop_header_branch
    %15 = sbr.rel (%p13) target = $region8
  $region5: #{multi_kernel_forward.1} parent=0 // loop_body
    %s17 = ssub.s32 %s12, 1
    %s18 = ssub.s32 %s12, 2
    %s19 = sadd.s32 %s12, 1
    %s20 = ssub.s32 %s12, %s19
    %p21 = scmp.eq.s32.totalorder %s20, 0
    %s23 = sadd.s32 %s22, 1
    %s24 = scalar_select %p21, %s22, %s23
    %p27 = pneg %p21
    %p28 = scmp.eq.s32.totalorder %s12, 1
    %p29 = por %p27, %p28
    %p30 = scmp.ne.s32.totalorder %s22, %s25
    %p31 = scmp.eq.s32.totalorder %s12, 0
    %p32 = por %p30, %p31
    %p33 = scmp.ne.s32.totalorder %s22, %s25
    %p34 = scmp.eq.s32.totalorder %s17, 1
    %p35 = por %p33, %p34
    %p36 = scmp.ne.s32.totalorder %s25, %s26
    %p37 = scmp.eq.s32.totalorder %s17, 0
    %p38 = por %p36, %p37
    %p39 = scmp.ne.s32.totalorder %s25, %s26
    %p40 = scmp.eq.s32.totalorder %s18, 1
    %p41 = por %p39, %p40
    %p43 = scmp.ne.s32.totalorder %s26, %s42
    %p44 = scmp.eq.s32.totalorder %s18, 0
    %p45 = por %p43, %p44
    %s47 = sadd.s32 %s46, 1
    %p50 = scmp.eq.s32.totalorder %s12, 1
    %p51 = scmp.ne.s32.totalorder %s46, %s48
    %p52 = scmp.eq.s32.totalorder %s12, 0
    %p53 = por %p51, %p52
    %p54 = scmp.ne.s32.totalorder %s46, %s48
    %p55 = scmp.eq.s32.totalorder %s17, 1
    %p56 = por %p54, %p55
    %p57 = scmp.ne.s32.totalorder %s48, %s49
    %p58 = scmp.eq.s32.totalorder %s17, 0
    %p59 = por %p57, %p58
    %p60 = scmp.ne.s32.totalorder %s48, %s49
    %p61 = scmp.eq.s32.totalorder %s18, 1
    %p62 = por %p60, %p61
    %p64 = scmp.ne.s32.totalorder %s49, %s63
    %p65 = scmp.eq.s32.totalorder %s18, 0
    %p66 = por %p64, %p65
    %s68 = sadd.s32 %s67, 1
    %p71 = scmp.eq.s32.totalorder %s12, 1
    %p72 = scmp.ne.s32.totalorder %s67, %s69
    %p73 = scmp.eq.s32.totalorder %s12, 0
    %p74 = por %p72, %p73
    %p75 = scmp.ne.s32.totalorder %s67, %s69
    %p76 = scmp.eq.s32.totalorder %s17, 1
    %p77 = por %p75, %p76
    %p78 = scmp.ne.s32.totalorder %s69, %s70
    %p79 = scmp.eq.s32.totalorder %s17, 0
    %p80 = por %p78, %p79
    %p81 = scmp.ne.s32.totalorder %s69, %s70
    %p82 = scmp.eq.s32.totalorder %s18, 1
    %p83 = por %p81, %p82
    %p85 = scmp.ne.s32.totalorder %s70, %s84
    %p86 = scmp.eq.s32.totalorder %s18, 0
    %p87 = por %p85, %p86
    %s89 = sadd.s32 %s88, 1
    %p92 = scmp.eq.s32.totalorder %s12, 1
    %p93 = scmp.ne.s32.totalorder %s88, %s90
    %p94 = scmp.eq.s32.totalorder %s12, 0
    %p95 = por %p93, %p94
    %p96 = scmp.ne.s32.totalorder %s88, %s90
    %p97 = scmp.eq.s32.totalorder %s17, 1
    %p98 = por %p96, %p97
    %p99 = scmp.ne.s32.totalorder %s90, %s91
    %p100 = scmp.eq.s32.totalorder %s17, 0
    %p101 = por %p99, %p100
    %p102 = scmp.ne.s32.totalorder %s90, %s91
    %p103 = scmp.eq.s32.totalorder %s18, 1
    %p104 = por %p102, %p103
    %p106 = scmp.ne.s32.totalorder %s91, %s105
    %p107 = scmp.eq.s32.totalorder %s18, 0
    %p108 = por %p106, %p107
    %s110 = sadd.s32 %s109, 1
    %p113 = scmp.eq.s32.totalorder %s12, 1
    %p114 = scmp.ne.s32.totalorder %s109, %s111
    %p115 = scmp.eq.s32.totalorder %s12, 0
    %p116 = por %p114, %p115
    %p117 = scmp.ne.s32.totalorder %s109, %s111
    %p118 = scmp.eq.s32.totalorder %s17, 1
    %p119 = por %p117, %p118
    %p120 = scmp.ne.s32.totalorder %s111, %s112
    %p121 = scmp.eq.s32.totalorder %s17, 0
    %p122 = por %p120, %p121
    %p123 = scmp.ne.s32.totalorder %s111, %s112
    %p124 = scmp.eq.s32.totalorder %s18, 1
    %p125 = por %p123, %p124
    %p127 = scmp.ne.s32.totalorder %s112, %s126
    %p128 = scmp.eq.s32.totalorder %s18, 0
    %p129 = por %p127, %p128
    %s131 = sadd.s32 %s130, 1
    %p134 = scmp.eq.s32.totalorder %s12, 1
    %p135 = scmp.ne.s32.totalorder %s130, %s132
    %p136 = scmp.eq.s32.totalorder %s12, 0
    %p137 = por %p135, %p136
    %p138 = scmp.ne.s32.totalorder %s130, %s132
    %p139 = scmp.eq.s32.totalorder %s17, 1
    %p140 = por %p138, %p139
    %p141 = scmp.ne.s32.totalorder %s132, %s133
    %p142 = scmp.eq.s32.totalorder %s17, 0
    %p143 = por %p141, %p142
    %p144 = scmp.ne.s32.totalorder %s132, %s133
    %p145 = scmp.eq.s32.totalorder %s18, 1
    %p146 = por %p144, %p145
    %p148 = scmp.ne.s32.totalorder %s133, %s147
    %p149 = scmp.eq.s32.totalorder %s18, 0
    %p150 = por %p148, %p149
    %s151 = ssub.s32 %s12, %s19
    %p152 = scmp.eq.s32.totalorder %s151, 0
    %s154 = sadd.s32 %s153, 1
    %s155 = scalar_select %p152, %s153, %s154
    %p158 = pneg %p152
    %p159 = scmp.eq.s32.totalorder %s12, 1
    %p160 = por %p158, %p159
    %p161 = scmp.ne.s32.totalorder %s153, %s156
    %p162 = scmp.eq.s32.totalorder %s12, 0
    %p163 = por %p161, %p162
    %p164 = scmp.ne.s32.totalorder %s153, %s156
    %p165 = scmp.eq.s32.totalorder %s17, 1
    %p166 = por %p164, %p165
    %p167 = scmp.ne.s32.totalorder %s156, %s157
    %p168 = scmp.eq.s32.totalorder %s17, 0
    %p169 = por %p167, %p168
    %p170 = scmp.ne.s32.totalorder %s156, %s157
    %p171 = scmp.eq.s32.totalorder %s18, 1
    %p172 = por %p170, %p171
    %p174 = scmp.ne.s32.totalorder %s157, %s173
    %p175 = scmp.eq.s32.totalorder %s18, 0
    %p176 = por %p174, %p175
    %p177 = scmp.le.s32.totalorder 1, %s12
    %p178 = scmp.lt.s32.totalorder %s12, 3
    %p179 = pnand %p177, %p178
    %p180 = pneg %p179
    // Predicated region
    $region9: #{multi_kernel_forward.1} parent=5 // pred_check
      _
    $region10: #{multi_kernel_forward.1} parent=5 // pred_check_branch
      %182 = sbr.rel (%p179) target = $region12
    $region11: #{multi_kernel_forward.1} parent=5 // pred_region
      %s183 = ssub.s32 %s12, 1
      // Predicated region
      $region13: #{multi_kernel_forward.1} parent=11 // pred_check
        %p184 = pneg %p59
      $region14: #{multi_kernel_forward.1} parent=11 // pred_check_branch
        %186 = sbr.rel (%p184) target = $region16
      $region15: #{multi_kernel_forward.1} parent=11 // pred_region
        _
      $region16: #{multi_kernel_forward.1} parent=11 // pred_fallthru
        _
      // Predicated region
      $region17: #{multi_kernel_forward.1} parent=11 // pred_check
        %p187 = pneg %p80
      $region18: #{multi_kernel_forward.1} parent=11 // pred_check_branch
        %189 = sbr.rel (%p187) target = $region20
      $region19: #{multi_kernel_forward.1} parent=11 // pred_region
        _
      $region20: #{multi_kernel_forward.1} parent=11 // pred_fallthru
        _
      // Predicated region
      $region21: #{multi_kernel_forward.1} parent=11 // pred_check
        %p190 = pneg %p101
      $region22: #{multi_kernel_forward.1} parent=11 // pred_check_branch
        %192 = sbr.rel (%p190) target = $region24
      $region23: #{multi_kernel_forward.1} parent=11 // pred_region
        _
      $region24: #{multi_kernel_forward.1} parent=11 // pred_fallthru
        _
      // Predicated region
      $region25: #{multi_kernel_forward.1} parent=11 // pred_check
        %p193 = pneg %p122
      $region26: #{multi_kernel_forward.1} parent=11 // pred_check_branch
        %195 = sbr.rel (%p193) target = $region28
      $region27: #{multi_kernel_forward.1} parent=11 // pred_region
        _
      $region28: #{multi_kernel_forward.1} parent=11 // pred_fallthru
        _
      // Predicated region
      $region29: #{multi_kernel_forward.1} parent=11 // pred_check
        %p196 = pneg %p143
      $region30: #{multi_kernel_forward.1} parent=11 // pred_check_branch
        %198 = sbr.rel (%p196) target = $region32
      $region31: #{multi_kernel_forward.1} parent=11 // pred_region
        _
      $region32: #{multi_kernel_forward.1} parent=11 // pred_fallthru
        _
    $region12: #{multi_kernel_forward.1} parent=5 // pred_fallthru
      _
    %p199 = scmp.lt.s32.totalorder %s12, 2
    // Predicated region
    $region33: #{multi_kernel_forward.1} parent=5 // pred_check
      %p200 = pneg %p199
    $region34: #{multi_kernel_forward.1} parent=5 // pred_check_branch
      %202 = sbr.rel (%p200) target = $region36
    $region35: #{multi_kernel_forward.1} parent=5 // pred_region
      // Predicated region
      $region37: #{multi_kernel_forward.1} parent=35 // pred_check
        %p203 = pneg %p32
      $region38: #{multi_kernel_forward.1} parent=35 // pred_check_branch
        %205 = sbr.rel (%p203) target = $region40
      $region39: #{multi_kernel_forward.1} parent=35 // pred_region
        %s206 = smul.u32 4, %s12
        %p207 = scmp.lt.s32.totalorder %s206, 7
        %s208 = scalar_select %p207, %s206, 7
        %s209 = smul.addr %s208, 4
        %s210 = smul.addr %s209, 4
        %s211 = scalar_lea.vmem %s0, %s210
        %s212 = smul.u32 4, %s12
      $region40: #{multi_kernel_forward.1} parent=35 // pred_fallthru
        _
    $region36: #{multi_kernel_forward.1} parent=5 // pred_fallthru
      _
    %p213 = scmp.le.s32.totalorder 1, %s12
    %p214 = scmp.lt.s32.totalorder %s12, 3
    %p215 = pnand %p213, %p214
    %p216 = pneg %p215
    // Predicated region
    $region41: #{multi_kernel_forward.1} parent=5 // pred_check
      _
    $region42: #{multi_kernel_forward.1} parent=5 // pred_check_branch
      %218 = sbr.rel (%p215) target = $region44
    $region43: #{multi_kernel_forward.1} parent=5 // pred_region
      %s219 = ssub.s32 %s12, 1
      %s220 = smul.u32 4, %s17
      %p221 = scmp.lt.s32.totalorder %s220, 7
      %s222 = scalar_select %p221, %s220, 7
      %s223 = smul.addr %s222, 4
      %s224 = smul.addr %s223, 4
      %s225 = scalar_lea.vmem %s0, %s224
      %p226 = pneg %p38
      %p227 = pneg %p35
      %p228 = pneg %p59
      %p229 = pneg %p56
      %p230 = pneg %p80
      %p231 = pneg %p77
      %p232 = pneg %p101
      %p233 = pneg %p98
      %p234 = pneg %p122
      %p235 = pneg %p119
      %p236 = pneg %p143
      %p237 = pneg %p140
      %p238 = pneg %p169
      %p239 = pneg %p166
      %s240 = smul.u32 4, %s17
      %p241 = scmp.lt.s32.totalorder %s240, 7
      %s242 = scalar_select %p241, %s240, 7
      %s243 = smul.addr %s242, 2
      %s244 = scalar_lea.vmem %s6, %s243
      %s245 = smul.u32 4, %s17
      %p246 = scmp.lt.s32.totalorder %s245, 7
      %s247 = scalar_select %p246, %s245, 7
      %s248 = smul.addr %s247, 4
      %s249 = smul.addr %s248, 4
      %s250 = scalar_lea.vmem %s0, %s249
      %s251 = smul.u32 4, %s17
      %s252 = smul.u32 4, %s17
      %p253 = scmp.lt.s32.totalorder %s252, 7
      %s254 = scalar_select %p253, %s252, 7
      %s255 = smul.addr %s254, 2
      %s256 = scalar_lea.vmem %s6, %s255
      %s257 = smul.u32 4, %s17
      %v259 = vld [vmem:[%s250] sm:$0xff]
      %v260 = vld [vmem:[%s250 + $0x8] sm:$0xff]
      %v261 = vld [vmem:[%s250 + $0x10] sm:$0xff]
      %v262 = vld [vmem:[%s250 + $0x18] sm:$0xff]
      %v263 = vld [vmem:[%s250 + $0x20] sm:$0xff]
      %v264 = vld [vmem:[%s250 + $0x28] sm:$0xff]
      %v265 = vld [vmem:[%s250 + $0x30] sm:$0xff]
      %v266 = vld [vmem:[%s250 + $0x38] sm:$0xff]
      %v267 = vunpack.c.l.bf16 %v259
      %v268 = vunpack.c.h.bf16 %v259
      %v269 = vunpack.c.l.bf16 %v260
      %v270 = vunpack.c.h.bf16 %v260
      %v271 = vunpack.c.l.bf16 %v261
      %v272 = vunpack.c.h.bf16 %v261
      %v273 = vunpack.c.l.bf16 %v262
      %v274 = vunpack.c.h.bf16 %v262
      %v275 = vunpack.c.l.bf16 %v263
      %v276 = vunpack.c.h.bf16 %v263
      %v277 = vunpack.c.l.bf16 %v264
      %v278 = vunpack.c.h.bf16 %v264
      %v279 = vunpack.c.l.bf16 %v265
      %v280 = vunpack.c.h.bf16 %v265
      %v281 = vunpack.c.l.bf16 %v266
      %v282 = vunpack.c.h.bf16 %v266
      %v283 = vld [vmem:[%s1] sm:$0xf]
      %v284 = vld [vmem:[%s1 + $0x4] sm:$0xf]
      %v285 = vld [vmem:[%s1 + $0x8] sm:$0xf]
      %v286 = vld [vmem:[%s1 + $0xc] sm:$0xf]
      %v287 = vld [vmem:[%s1 + $0x10] sm:$0xf]
      %v288 = vld [vmem:[%s1 + $0x14] sm:$0xf]
      %v289 = vld [vmem:[%s1 + $0x18] sm:$0xf]
      %v290 = vld [vmem:[%s1 + $0x1c] sm:$0xf]
      %v291 = vld [vmem:[%s1 + $0x20] sm:$0xf]
      %v292 = vld [vmem:[%s1 + $0x24] sm:$0xf]
      %v293 = vld [vmem:[%s1 + $0x28] sm:$0xf]
      %v294 = vld [vmem:[%s1 + $0x2c] sm:$0xf]
      %v295 = vld [vmem:[%s1 + $0x30] sm:$0xf]
      %v296 = vld [vmem:[%s1 + $0x34] sm:$0xf]
      %v297 = vld [vmem:[%s1 + $0x38] sm:$0xf]
      %v298 = vld [vmem:[%s1 + $0x3c] sm:$0xf]
      %v299 = vld [vmem:[%s1 + $0x40] sm:$0xf]
      %v300 = vld [vmem:[%s1 + $0x44] sm:$0xf]
      %v301 = vld [vmem:[%s1 + $0x48] sm:$0xf]
      %v302 = vld [vmem:[%s1 + $0x4c] sm:$0xf]
      %v303 = vld [vmem:[%s1 + $0x50] sm:$0xf]
      %v304 = vld [vmem:[%s1 + $0x54] sm:$0xf]
      %v305 = vld [vmem:[%s1 + $0x58] sm:$0xf]
      %v306 = vld [vmem:[%s1 + $0x5c] sm:$0xf]
      %v307 = vld [vmem:[%s1 + $0x60] sm:$0xf]
      %v308 = vld [vmem:[%s1 + $0x64] sm:$0xf]
      %v309 = vld [vmem:[%s1 + $0x68] sm:$0xf]
      %v310 = vld [vmem:[%s1 + $0x6c] sm:$0xf]
      %v311 = vld [vmem:[%s1 + $0x70] sm:$0xf]
      %v312 = vld [vmem:[%s1 + $0x74] sm:$0xf]
      %v313 = vld [vmem:[%s1 + $0x78] sm:$0xf]
      %v314 = vld [vmem:[%s1 + $0x7c] sm:$0xf]
      %v315 = vld [vmem:[%s2] sm:$0x1]
      %v317 = vlaneseq
      %v318 = vshrl.u32 %v317, 7
      %v319 = vsub.s32 0, %v318
      %v320 = vrot.slane %v315, %v319
      %v330 = vunpack.c.l.b16 %v259
      %v331 = vunpack.c.h.b16 %v259
      %v332 = vunpack.c.l.b16 %v260
      %v333 = vunpack.c.h.b16 %v260
      %v334 = vunpack.c.l.b16 %v261
      %v335 = vunpack.c.h.b16 %v261
      %v336 = vunpack.c.l.b16 %v262
      %v337 = vunpack.c.h.b16 %v262
      %v338 = vunpack.c.l.b16 %v263
      %v339 = vunpack.c.h.b16 %v263
      %v340 = vunpack.c.l.b16 %v264
      %v341 = vunpack.c.h.b16 %v264
      %v342 = vunpack.c.l.b16 %v265
      %v343 = vunpack.c.h.b16 %v265
      %v344 = vunpack.c.l.b16 %v266
      %v345 = vunpack.c.h.b16 %v266
      %v346 = vpack.c.b16 %v332, %v330
      %v347 = vpack.c.b16 %v333, %v331
      %v348 = vpack.c.b16 %v336, %v334
      %v349 = vpack.c.b16 %v337, %v335
      %v350 = vpack.c.b16 %v340, %v338
      %v351 = vpack.c.b16 %v341, %v339
      %v352 = vpack.c.b16 %v344, %v342
      %v353 = vpack.c.b16 %v345, %v343
      %v394 = vunpack.c.l.b16 %v283
      %v395 = vunpack.c.l.b16 %v284
      %v396 = vunpack.c.l.b16 %v285
      %v397 = vunpack.c.l.b16 %v286
      %v398 = vunpack.c.l.b16 %v287
      %v399 = vunpack.c.l.b16 %v288
      %v400 = vunpack.c.l.b16 %v289
      %v401 = vunpack.c.l.b16 %v290
      %v402 = vunpack.c.l.b16 %v291
      %v403 = vunpack.c.l.b16 %v292
      %v404 = vunpack.c.l.b16 %v293
      %v405 = vunpack.c.l.b16 %v294
      %v406 = vunpack.c.l.b16 %v295
      %v407 = vunpack.c.l.b16 %v296
      %v408 = vunpack.c.l.b16 %v297
      %v409 = vunpack.c.l.b16 %v298
      %v410 = vunpack.c.l.b16 %v299
      %v411 = vunpack.c.l.b16 %v300
      %v412 = vunpack.c.l.b16 %v301
      %v413 = vunpack.c.l.b16 %v302
      %v414 = vunpack.c.l.b16 %v303
      %v415 = vunpack.c.l.b16 %v304
      %v416 = vunpack.c.l.b16 %v305
      %v417 = vunpack.c.l.b16 %v306
      %v418 = vunpack.c.l.b16 %v307
      %v419 = vunpack.c.l.b16 %v308
      %v420 = vunpack.c.l.b16 %v309
      %v421 = vunpack.c.l.b16 %v310
      %v422 = vunpack.c.l.b16 %v311
      %v423 = vunpack.c.l.b16 %v312
      %v424 = vunpack.c.l.b16 %v313
      %v425 = vunpack.c.l.b16 %v314
      %v426 = vpack.c.b16 %v395, %v394
      %v427 = vpack.c.b16 %v397, %v396
      %v428 = vpack.c.b16 %v399, %v398
      %v429 = vpack.c.b16 %v401, %v400
      %v430 = vpack.c.b16 %v403, %v402
      %v431 = vpack.c.b16 %v405, %v404
      %v432 = vpack.c.b16 %v407, %v406
      %v433 = vpack.c.b16 %v409, %v408
      %v434 = vpack.c.b16 %v411, %v410
      %v435 = vpack.c.b16 %v413, %v412
      %v436 = vpack.c.b16 %v415, %v414
      %v437 = vpack.c.b16 %v417, %v416
      %v438 = vpack.c.b16 %v419, %v418
      %v439 = vpack.c.b16 %v421, %v420
      %v440 = vpack.c.b16 %v423, %v422
      %v441 = vpack.c.b16 %v425, %v424
      %458 = vmatprep.subr.bf16.mxu0 0
      %459 = vmatpush1.bf16.msra.mxu0 %v426
      %460 = vmatprep.subr.bf16.mxu0 0
      %461 = vmatpush1.bf16.msra.mxu0 %v427
      %462 = vmatprep.subr.bf16.mxu0 0
      %463 = vmatpush1.bf16.msra.mxu0 %v428
      %464 = vmatprep.subr.bf16.mxu0 0
      %465 = vmatpush1.bf16.msra.mxu0 %v429
      %466 = vmatprep.subr.bf16.mxu0 0
      %467 = vmatpush1.bf16.msra.mxu0 %v430
      %468 = vmatprep.subr.bf16.mxu0 0
      %469 = vmatpush1.bf16.msra.mxu0 %v431
      %470 = vmatprep.subr.bf16.mxu0 0
      %471 = vmatpush1.bf16.msra.mxu0 %v432
      %472 = vmatprep.subr.bf16.mxu0 0
      %473 = vmatpush1.bf16.msra.mxu0 %v433
      %474 = vmatprep.subr.bf16.mxu0 0
      %475 = vmatpush1.bf16.msra.mxu0 %v434
      %476 = vmatprep.subr.bf16.mxu0 0
      %477 = vmatpush1.bf16.msra.mxu0 %v435
      %478 = vmatprep.subr.bf16.mxu0 0
      %479 = vmatpush1.bf16.msra.mxu0 %v436
      %480 = vmatprep.subr.bf16.mxu0 0
      %481 = vmatpush1.bf16.msra.mxu0 %v437
      %482 = vmatprep.subr.bf16.mxu0 0
      %483 = vmatpush1.bf16.msra.mxu0 %v438
      %484 = vmatprep.subr.bf16.mxu0 0
      %485 = vmatpush1.bf16.msra.mxu0 %v439
      %486 = vmatprep.subr.bf16.mxu0 0
      %487 = vmatpush1.bf16.msra.mxu0 %v440
      %488 = vmatprep.subr.bf16.mxu0 0
      %489 = vmatpush1.bf16.msra.mxu0 %v441
      %490 = vmatprep.mubr.bf16.mxu0 %v347
      %491 = vmatmul.mubr.bf16.gmra.mrb[0].mxu0 %v346
      %v492 = vpop.f32.mrb[0].mxu0
      %v493 = vadd.f32 %v320, %v492
      %v494 = vpop.f32.mrb[0].mxu0
      %v495 = vpop.f32.mrb[0].mxu0
      %v496 = vadd.f32 %v320, %v495
      %v497 = vpop.f32.mrb[0].mxu0
      %498 = vmatprep.mubr.bf16.mxu0 %v349
      %499 = vmatmul.mubr.bf16.gmra.mrb[0].mxu0 %v348
      %v500 = vpop.f32.mrb[0].mxu0
      %v501 = vadd.f32 %v320, %v500
      %v502 = vpop.f32.mrb[0].mxu0
      %v503 = vpop.f32.mrb[0].mxu0
      %v504 = vadd.f32 %v320, %v503
      %v505 = vpop.f32.mrb[0].mxu0
      %506 = vmatprep.mubr.bf16.mxu0 %v351
      %507 = vmatmul.mubr.bf16.gmra.mrb[0].mxu0 %v350
      %v508 = vpop.f32.mrb[0].mxu0
      %v509 = vadd.f32 %v320, %v508
      %v510 = vpop.f32.mrb[0].mxu0
      %v511 = vpop.f32.mrb[0].mxu0
      %v512 = vadd.f32 %v320, %v511
      %v513 = vpop.f32.mrb[0].mxu0
      %514 = vmatprep.mubr.bf16.mxu0 %v353
      %515 = vmatmul.mubr.bf16.gmra.mrb[0].mxu0 %v352
      %v516 = vpop.f32.mrb[0].mxu0
      %v517 = vadd.f32 %v320, %v516
      %v518 = vpop.f32.mrb[0].mxu0
      %v519 = vpop.f32.mrb[0].mxu0
      %v520 = vadd.f32 %v320, %v519
      %v521 = vpop.f32.mrb[0].mxu0
      %522 = vdwg.mxu0
      %v523 = vmax.f32 %v493, 0.0
      %v524 = vmax.f32 %v496, 0.0
      %v525 = vmax.f32 %v501, 0.0
      %v526 = vmax.f32 %v504, 0.0
      %v527 = vmax.f32 %v509, 0.0
      %v528 = vmax.f32 %v512, 0.0
      %v529 = vmax.f32 %v517, 0.0
      %v530 = vmax.f32 %v520, 0.0
      %v531 = vlaneseq
      %v532 = vshrl.u32 %v531, 7
      %v533 = vadd.s32 %v532, 8
      %v534 = vadd.s32 %v532, 16
      %v535 = vadd.s32 %v532, 24
      %v536 = vadd.s32 %v532, 32
      %v537 = vadd.s32 %v532, 40
      %v538 = vadd.s32 %v532, 48
      %v539 = vadd.s32 %v532, 56
      %vm540 = vcmp.lt.s32.totalorder %v532, 0
      %v541 = vsub.s32 0, %v532
      %v542 = vsel %vm540, %v541, %v532
      %v543 = vshrl.u32 %v542, 4
      %v544 = vand.u32 %v542, 15
      %v545 = vsub.s32 0, %v544
      %v546 = vsel %vm540, %v545, %v544
      %vm547 = vcmp.lt.s32.totalorder %v533, 0
      %v548 = vsub.s32 0, %v533
      %v549 = vsel %vm547, %v548, %v533
      %v550 = vshrl.u32 %v549, 4
      %v551 = vand.u32 %v549, 15
      %v552 = vsub.s32 0, %v551
      %v553 = vsel %vm547, %v552, %v551
      %vm554 = vcmp.lt.s32.totalorder %v534, 0
      %v555 = vsub.s32 0, %v534
      %v556 = vsel %vm554, %v555, %v534
      %v557 = vshrl.u32 %v556, 4
      %v558 = vand.u32 %v556, 15
      %v559 = vsub.s32 0, %v558
      %v560 = vsel %vm554, %v559, %v558
      %vm561 = vcmp.lt.s32.totalorder %v535, 0
      %v562 = vsub.s32 0, %v535
      %v563 = vsel %vm561, %v562, %v535
      %v564 = vshrl.u32 %v563, 4
      %v565 = vand.u32 %v563, 15
      %v566 = vsub.s32 0, %v565
      %v567 = vsel %vm561, %v566, %v565
      %vm568 = vcmp.lt.s32.totalorder %v536, 0
      %v569 = vsub.s32 0, %v536
      %v570 = vsel %vm568, %v569, %v536
      %v571 = vshrl.u32 %v570, 4
      %v572 = vand.u32 %v570, 15
      %v573 = vsub.s32 0, %v572
      %v574 = vsel %vm568, %v573, %v572
      %vm575 = vcmp.lt.s32.totalorder %v537, 0
      %v576 = vsub.s32 0, %v537
      %v577 = vsel %vm575, %v576, %v537
      %v578 = vshrl.u32 %v577, 4
      %v579 = vand.u32 %v577, 15
      %v580 = vsub.s32 0, %v579
      %v581 = vsel %vm575, %v580, %v579
      %vm582 = vcmp.lt.s32.totalorder %v538, 0
      %v583 = vsub.s32 0, %v538
      %v584 = vsel %vm582, %v583, %v538
      %v585 = vshrl.u32 %v584, 4
      %v586 = vand.u32 %v584, 15
      %v587 = vsub.s32 0, %v586
      %v588 = vsel %vm582, %v587, %v586
      %vm589 = vcmp.lt.s32.totalorder %v539, 0
      %v590 = vsub.s32 0, %v539
      %v591 = vsel %vm589, %v590, %v539
      %v592 = vshrl.u32 %v591, 4
      %v593 = vand.u32 %v591, 15
      %v594 = vsub.s32 0, %v593
      %v595 = vsel %vm589, %v594, %v593
      %vm596 = vcmp.ne.s32.totalorder %v546, 0
      %vm597 = vcmp.ne.s32.totalorder %v553, 0
      %vm598 = vcmp.ne.s32.totalorder %v560, 0
      %vm599 = vcmp.ne.s32.totalorder %v567, 0
      %vm600 = vcmp.ne.s32.totalorder %v574, 0
      %vm601 = vcmp.ne.s32.totalorder %v581, 0
      %vm602 = vcmp.ne.s32.totalorder %v588, 0
      %vm603 = vcmp.ne.s32.totalorder %v595, 0
      %vm604 = vcmp.lt.s32.totalorder %v546, 0
      %vm605 = vcmp.lt.s32.totalorder %v553, 0
      %vm606 = vcmp.lt.s32.totalorder %v560, 0
      %vm607 = vcmp.lt.s32.totalorder %v567, 0
      %vm608 = vcmp.lt.s32.totalorder %v574, 0
      %vm609 = vcmp.lt.s32.totalorder %v581, 0
      %vm610 = vcmp.lt.s32.totalorder %v588, 0
      %vm611 = vcmp.lt.s32.totalorder %v595, 0
      %vm612 = vmand %vm604, %vm596
      %vm613 = vmand %vm605, %vm597
      %vm614 = vmand %vm606, %vm598
      %vm615 = vmand %vm607, %vm599
      %vm616 = vmand %vm608, %vm600
      %vm617 = vmand %vm609, %vm601
      %vm618 = vmand %vm610, %vm602
      %vm619 = vmand %vm611, %vm603
      %v620 = vadd.s32 %v546, 16
      %v621 = vadd.s32 %v553, 16
      %v622 = vadd.s32 %v560, 16
      %v623 = vadd.s32 %v567, 16
      %v624 = vadd.s32 %v574, 16
      %v625 = vadd.s32 %v581, 16
      %v626 = vadd.s32 %v588, 16
      %v627 = vadd.s32 %v595, 16
      %v628 = vsel %vm612, %v620, %v546
      %v629 = vsel %vm613, %v621, %v553
      %v630 = vsel %vm614, %v622, %v560
      %v631 = vsel %vm615, %v623, %v567
      %v632 = vsel %vm616, %v624, %v574
      %v633 = vsel %vm617, %v625, %v581
      %v634 = vsel %vm618, %v626, %v588
      %v635 = vsel %vm619, %v627, %v595
      %v636 = vrot.slane %v523, 3
      %v637 = vrot.slane %v524, 3
      %v638 = vrot.slane %v525, 3
      %v639 = vrot.slane %v526, 3
      %v640 = vrot.slane %v527, 3
      %v641 = vrot.slane %v528, 3
      %v642 = vrot.slane %v529, 3
      %v643 = vrot.slane %v530, 3
      %vm644 = vcmp.lt.s32.totalorder %v532, 5
      %v645 = vsel %vm644, %v642, %v643
      %v646 = vsel %vm644, %v641, %v642
      %v647 = vsel %vm644, %v640, %v641
      %v648 = vsel %vm644, %v639, %v640
      %v649 = vsel %vm644, %v638, %v639
      %v650 = vsel %vm644, %v637, %v638
      %v651 = vsel %vm644, %v636, %v637
      %v652 = vsel %vm644, %v643, %v636
      %vm653 = vcmp.ge.s32.totalorder %v628, 4294967293
      %vm654 = vcmp.ge.s32.totalorder %v629, 4294967293
      %vm655 = vcmp.ge.s32.totalorder %v630, 4294967293
      %vm656 = vcmp.ge.s32.totalorder %v631, 4294967293
      %vm657 = vcmp.ge.s32.totalorder %v632, 4294967293
      %vm658 = vcmp.ge.s32.totalorder %v633, 4294967293
      %vm659 = vcmp.ge.s32.totalorder %v634, 4294967293
      %vm660 = vcmp.ge.s32.totalorder %v635, 4294967293
      %vm661 = vcmp.lt.s32.totalorder %v628, 13
      %vm662 = vcmp.lt.s32.totalorder %v629, 13
      %vm663 = vcmp.lt.s32.totalorder %v630, 13
      %vm664 = vcmp.lt.s32.totalorder %v631, 13
      %vm665 = vcmp.lt.s32.totalorder %v632, 13
      %vm666 = vcmp.lt.s32.totalorder %v633, 13
      %vm667 = vcmp.lt.s32.totalorder %v634, 13
      %vm668 = vcmp.lt.s32.totalorder %v635, 13
      %vm669 = vmand %vm653, %vm661
      %vm670 = vmand %vm654, %vm662
      %vm671 = vmand %vm655, %vm663
      %vm672 = vmand %vm656, %vm664
      %vm673 = vmand %vm657, %vm665
      %vm674 = vmand %vm658, %vm666
      %vm675 = vmand %vm659, %vm667
      %vm676 = vmand %vm660, %vm668
      %v677 = vsel %vm669, %v651, 0.0
      %v678 = vsel %vm670, %v650, 0.0
      %v679 = vsel %vm671, %v649, 0.0
      %v680 = vsel %vm672, %v648, 0.0
      %v681 = vsel %vm673, %v647, 0.0
      %v682 = vsel %vm674, %v646, 0.0
      %v683 = vsel %vm675, %v645, 0.0
      %v684 = vsel %vm676, %v652, 0.0
      %v685 = vrot.slane %v523, 2
      %v686 = vrot.slane %v524, 2
      %v687 = vrot.slane %v525, 2
      %v688 = vrot.slane %v526, 2
      %v689 = vrot.slane %v527, 2
      %v690 = vrot.slane %v528, 2
      %v691 = vrot.slane %v529, 2
      %v692 = vrot.slane %v530, 2
      %vm693 = vcmp.lt.s32.totalorder %v532, 6
      %v694 = vsel %vm693, %v691, %v692
      %v695 = vsel %vm693, %v690, %v691
      %v696 = vsel %vm693, %v689, %v690
      %v697 = vsel %vm693, %v688, %v689
      %v698 = vsel %vm693, %v687, %v688
      %v699 = vsel %vm693, %v686, %v687
      %v700 = vsel %vm693, %v685, %v686
      %v701 = vsel %vm693, %v692, %v685
      %vm702 = vcmp.ge.s32.totalorder %v628, 4294967294
      %vm703 = vcmp.ge.s32.totalorder %v629, 4294967294
      %vm704 = vcmp.ge.s32.totalorder %v630, 4294967294
      %vm705 = vcmp.ge.s32.totalorder %v631, 4294967294
      %vm706 = vcmp.ge.s32.totalorder %v632, 4294967294
      %vm707 = vcmp.ge.s32.totalorder %v633, 4294967294
      %vm708 = vcmp.ge.s32.totalorder %v634, 4294967294
      %vm709 = vcmp.ge.s32.totalorder %v635, 4294967294
      %vm710 = vcmp.lt.s32.totalorder %v628, 14
      %vm711 = vcmp.lt.s32.totalorder %v629, 14
      %vm712 = vcmp.lt.s32.totalorder %v630, 14
      %vm713 = vcmp.lt.s32.totalorder %v631, 14
      %vm714 = vcmp.lt.s32.totalorder %v632, 14
      %vm715 = vcmp.lt.s32.totalorder %v633, 14
      %vm716 = vcmp.lt.s32.totalorder %v634, 14
      %vm717 = vcmp.lt.s32.totalorder %v635, 14
      %vm718 = vmand %vm702, %vm710
      %vm719 = vmand %vm703, %vm711
      %vm720 = vmand %vm704, %vm712
      %vm721 = vmand %vm705, %vm713
      %vm722 = vmand %vm706, %vm714
      %vm723 = vmand %vm707, %vm715
      %vm724 = vmand %vm708, %vm716
      %vm725 = vmand %vm709, %vm717
      %v726 = vsel %vm718, %v700, 0.0
      %v727 = vsel %vm719, %v699, 0.0
      %v728 = vsel %vm720, %v698, 0.0
      %v729 = vsel %vm721, %v697, 0.0
      %v730 = vsel %vm722, %v696, 0.0
      %v731 = vsel %vm723, %v695, 0.0
      %v732 = vsel %vm724, %v694, 0.0
      %v733 = vsel %vm725, %v701, 0.0
      %v734 = vrot.slane %v523, 1
      %v735 = vrot.slane %v524, 1
      %v736 = vrot.slane %v525, 1
      %v737 = vrot.slane %v526, 1
      %v738 = vrot.slane %v527, 1
      %v739 = vrot.slane %v528, 1
      %v740 = vrot.slane %v529, 1
      %v741 = vrot.slane %v530, 1
      %vm742 = vcmp.lt.s32.totalorder %v532, 7
      %v743 = vsel %vm742, %v740, %v741
      %v744 = vsel %vm742, %v739, %v740
      %v745 = vsel %vm742, %v738, %v739
      %v746 = vsel %vm742, %v737, %v738
      %v747 = vsel %vm742, %v736, %v737
      %v748 = vsel %vm742, %v735, %v736
      %v749 = vsel %vm742, %v734, %v735
      %v750 = vsel %vm742, %v741, %v734
      %vm751 = vcmp.ge.s32.totalorder %v628, 4294967295
      %vm752 = vcmp.ge.s32.totalorder %v629, 4294967295
      %vm753 = vcmp.ge.s32.totalorder %v630, 4294967295
      %vm754 = vcmp.ge.s32.totalorder %v631, 4294967295
      %vm755 = vcmp.ge.s32.totalorder %v632, 4294967295
      %vm756 = vcmp.ge.s32.totalorder %v633, 4294967295
      %vm757 = vcmp.ge.s32.totalorder %v634, 4294967295
      %vm758 = vcmp.ge.s32.totalorder %v635, 4294967295
      %vm759 = vcmp.lt.s32.totalorder %v628, 15
      %vm760 = vcmp.lt.s32.totalorder %v629, 15
      %vm761 = vcmp.lt.s32.totalorder %v630, 15
      %vm762 = vcmp.lt.s32.totalorder %v631, 15
      %vm763 = vcmp.lt.s32.totalorder %v632, 15
      %vm764 = vcmp.lt.s32.totalorder %v633, 15
      %vm765 = vcmp.lt.s32.totalorder %v634, 15
      %vm766 = vcmp.lt.s32.totalorder %v635, 15
      %vm767 = vmand %vm751, %vm759
      %vm768 = vmand %vm752, %vm760
      %vm769 = vmand %vm753, %vm761
      %vm770 = vmand %vm754, %vm762
      %vm771 = vmand %vm755, %vm763
      %vm772 = vmand %vm756, %vm764
      %vm773 = vmand %vm757, %vm765
      %vm774 = vmand %vm758, %vm766
      %v775 = vsel %vm767, %v749, 0.0
      %v776 = vsel %vm768, %v748, 0.0
      %v777 = vsel %vm769, %v747, 0.0
      %v778 = vsel %vm770, %v746, 0.0
      %v779 = vsel %vm771, %v745, 0.0
      %v780 = vsel %vm772, %v744, 0.0
      %v781 = vsel %vm773, %v743, 0.0
      %v782 = vsel %vm774, %v750, 0.0
      %v783 = vrot.slane %v523, 7
      %v784 = vrot.slane %v524, 7
      %v785 = vrot.slane %v525, 7
      %v786 = vrot.slane %v526, 7
      %v787 = vrot.slane %v527, 7
      %v788 = vrot.slane %v528, 7
      %v789 = vrot.slane %v529, 7
      %v790 = vrot.slane %v530, 7
      %vm791 = vcmp.lt.s32.totalorder %v532, 1
      %v792 = vsel %vm791, %v789, %v790
      %v793 = vsel %vm791, %v788, %v789
      %v794 = vsel %vm791, %v787, %v788
      %v795 = vsel %vm791, %v786, %v787
      %v796 = vsel %vm791, %v785, %v786
      %v797 = vsel %vm791, %v784, %v785
      %v798 = vsel %vm791, %v783, %v784
      %v799 = vsel %vm791, %v790, %v783
      %vm800 = vcmp.ge.s32.totalorder %v628, 1
      %vm801 = vcmp.ge.s32.totalorder %v629, 1
      %vm802 = vcmp.ge.s32.totalorder %v630, 1
      %vm803 = vcmp.ge.s32.totalorder %v631, 1
      %vm804 = vcmp.ge.s32.totalorder %v632, 1
      %vm805 = vcmp.ge.s32.totalorder %v633, 1
      %vm806 = vcmp.ge.s32.totalorder %v634, 1
      %vm807 = vcmp.ge.s32.totalorder %v635, 1
      %vm808 = vcmp.lt.s32.totalorder %v628, 17
      %vm809 = vcmp.lt.s32.totalorder %v629, 17
      %vm810 = vcmp.lt.s32.totalorder %v630, 17
      %vm811 = vcmp.lt.s32.totalorder %v631, 17
      %vm812 = vcmp.lt.s32.totalorder %v632, 17
      %vm813 = vcmp.lt.s32.totalorder %v633, 17
      %vm814 = vcmp.lt.s32.totalorder %v634, 17
      %vm815 = vcmp.lt.s32.totalorder %v635, 17
      %vm816 = vmand %vm800, %vm808
      %vm817 = vmand %vm801, %vm809
      %vm818 = vmand %vm802, %vm810
      %vm819 = vmand %vm803, %vm811
      %vm820 = vmand %vm804, %vm812
      %vm821 = vmand %vm805, %vm813
      %vm822 = vmand %vm806, %vm814
      %vm823 = vmand %vm807, %vm815
      %v824 = vsel %vm816, %v799, 0.0
      %v825 = vsel %vm817, %v798, 0.0
      %v826 = vsel %vm818, %v797, 0.0
      %v827 = vsel %vm819, %v796, 0.0
      %v828 = vsel %vm820, %v795, 0.0
      %v829 = vsel %vm821, %v794, 0.0
      %v830 = vsel %vm822, %v793, 0.0
      %v831 = vsel %vm823, %v792, 0.0
      %v832 = vrot.slane %v523, 6
      %v833 = vrot.slane %v524, 6
      %v834 = vrot.slane %v525, 6
      %v835 = vrot.slane %v526, 6
      %v836 = vrot.slane %v527, 6
      %v837 = vrot.slane %v528, 6
      %v838 = vrot.slane %v529, 6
      %v839 = vrot.slane %v530, 6
      %vm840 = vcmp.lt.s32.totalorder %v532, 2
      %v841 = vsel %vm840, %v838, %v839
      %v842 = vsel %vm840, %v837, %v838
      %v843 = vsel %vm840, %v836, %v837
      %v844 = vsel %vm840, %v835, %v836
      %v845 = vsel %vm840, %v834, %v835
      %v846 = vsel %vm840, %v833, %v834
      %v847 = vsel %vm840, %v832, %v833
      %v848 = vsel %vm840, %v839, %v832
      %vm849 = vcmp.ge.s32.totalorder %v628, 2
      %vm850 = vcmp.ge.s32.totalorder %v629, 2
      %vm851 = vcmp.ge.s32.totalorder %v630, 2
      %vm852 = vcmp.ge.s32.totalorder %v631, 2
      %vm853 = vcmp.ge.s32.totalorder %v632, 2
      %vm854 = vcmp.ge.s32.totalorder %v633, 2
      %vm855 = vcmp.ge.s32.totalorder %v634, 2
      %vm856 = vcmp.ge.s32.totalorder %v635, 2
      %vm857 = vcmp.lt.s32.totalorder %v628, 18
      %vm858 = vcmp.lt.s32.totalorder %v629, 18
      %vm859 = vcmp.lt.s32.totalorder %v630, 18
      %vm860 = vcmp.lt.s32.totalorder %v631, 18
      %vm861 = vcmp.lt.s32.totalorder %v632, 18
      %vm862 = vcmp.lt.s32.totalorder %v633, 18
      %vm863 = vcmp.lt.s32.totalorder %v634, 18
      %vm864 = vcmp.lt.s32.totalorder %v635, 18
      %vm865 = vmand %vm849, %vm857
      %vm866 = vmand %vm850, %vm858
      %vm867 = vmand %vm851, %vm859
      %vm868 = vmand %vm852, %vm860
      %vm869 = vmand %vm853, %vm861
      %vm870 = vmand %vm854, %vm862
      %vm871 = vmand %vm855, %vm863
      %vm872 = vmand %vm856, %vm864
      %v873 = vsel %vm865, %v848, 0.0
      %v874 = vsel %vm866, %v847, 0.0
      %v875 = vsel %vm867, %v846, 0.0
      %v876 = vsel %vm868, %v845, 0.0
      %v877 = vsel %vm869, %v844, 0.0
      %v878 = vsel %vm870, %v843, 0.0
      %v879 = vsel %vm871, %v842, 0.0
      %v880 = vsel %vm872, %v841, 0.0
      %v881 = vrot.slane %v523, 5
      %v882 = vrot.slane %v524, 5
      %v883 = vrot.slane %v525, 5
      %v884 = vrot.slane %v526, 5
      %v885 = vrot.slane %v527, 5
      %v886 = vrot.slane %v528, 5
      %v887 = vrot.slane %v529, 5
      %v888 = vrot.slane %v530, 5
      %vm889 = vcmp.lt.s32.totalorder %v532, 3
      %v890 = vsel %vm889, %v887, %v888
      %v891 = vsel %vm889, %v886, %v887
      %v892 = vsel %vm889, %v885, %v886
      %v893 = vsel %vm889, %v884, %v885
      %v894 = vsel %vm889, %v883, %v884
      %v895 = vsel %vm889, %v882, %v883
      %v896 = vsel %vm889, %v881, %v882
      %v897 = vsel %vm889, %v888, %v881
      %vm898 = vcmp.ge.s32.totalorder %v628, 3
      %vm899 = vcmp.ge.s32.totalorder %v629, 3
      %vm900 = vcmp.ge.s32.totalorder %v630, 3
      %vm901 = vcmp.ge.s32.totalorder %v631, 3
      %vm902 = vcmp.ge.s32.totalorder %v632, 3
      %vm903 = vcmp.ge.s32.totalorder %v633, 3
      %vm904 = vcmp.ge.s32.totalorder %v634, 3
      %vm905 = vcmp.ge.s32.totalorder %v635, 3
      %vm906 = vcmp.lt.s32.totalorder %v628, 19
      %vm907 = vcmp.lt.s32.totalorder %v629, 19
      %vm908 = vcmp.lt.s32.totalorder %v630, 19
      %vm909 = vcmp.lt.s32.totalorder %v631, 19
      %vm910 = vcmp.lt.s32.totalorder %v632, 19
      %vm911 = vcmp.lt.s32.totalorder %v633, 19
      %vm912 = vcmp.lt.s32.totalorder %v634, 19
      %vm913 = vcmp.lt.s32.totalorder %v635, 19
      %vm914 = vmand %vm898, %vm906
      %vm915 = vmand %vm899, %vm907
      %vm916 = vmand %vm900, %vm908
      %vm917 = vmand %vm901, %vm909
      %vm918 = vmand %vm902, %vm910
      %vm919 = vmand %vm903, %vm911
      %vm920 = vmand %vm904, %vm912
      %vm921 = vmand %vm905, %vm913
      %v922 = vsel %vm914, %v897, 0.0
      %v923 = vsel %vm915, %v896, 0.0
      %v924 = vsel %vm916, %v895, 0.0
      %v925 = vsel %vm917, %v894, 0.0
      %v926 = vsel %vm918, %v893, 0.0
      %v927 = vsel %vm919, %v892, 0.0
      %v928 = vsel %vm920, %v891, 0.0
      %v929 = vsel %vm921, %v890, 0.0
      %938 = vrot.lane.b32.xlu0 %v726, 12
      %v939 = vpop.permute.xlu0 %938
      %940 = vrot.lane.b32.xlu0 %v727, 12
      %v941 = vpop.permute.xlu0 %940
      %942 = vrot.lane.b32.xlu0 %v728, 12
      %v943 = vpop.permute.xlu0 %942
      %944 = vrot.lane.b32.xlu0 %v729, 12
      %v945 = vpop.permute.xlu0 %944
      %946 = vrot.lane.b32.xlu0 %v730, 12
      %v947 = vpop.permute.xlu0 %946
      %948 = vrot.lane.b32.xlu0 %v731, 12
      %v949 = vpop.permute.xlu0 %948
      %950 = vrot.lane.b32.xlu0 %v732, 12
      %v951 = vpop.permute.xlu0 %950
      %952 = vrot.lane.b32.xlu0 %v733, 12
      %v953 = vpop.permute.xlu0 %952
      %970 = vrot.lane.b32.xlu0 %v775, 24
      %v971 = vpop.permute.xlu0 %970
      %972 = vrot.lane.b32.xlu0 %v776, 24
      %v973 = vpop.permute.xlu0 %972
      %974 = vrot.lane.b32.xlu0 %v777, 24
      %v975 = vpop.permute.xlu0 %974
      %976 = vrot.lane.b32.xlu0 %v778, 24
      %v977 = vpop.permute.xlu0 %976
      %978 = vrot.lane.b32.xlu0 %v779, 24
      %v979 = vpop.permute.xlu0 %978
      %980 = vrot.lane.b32.xlu0 %v780, 24
      %v981 = vpop.permute.xlu0 %980
      %982 = vrot.lane.b32.xlu0 %v781, 24
      %v983 = vpop.permute.xlu0 %982
      %984 = vrot.lane.b32.xlu0 %v782, 24
      %v985 = vpop.permute.xlu0 %984
      %1002 = vrot.lane.b32.xlu0 %v523, 36
      %v1003 = vpop.permute.xlu0 %1002
      %1004 = vrot.lane.b32.xlu0 %v524, 36
      %v1005 = vpop.permute.xlu0 %1004
      %1006 = vrot.lane.b32.xlu0 %v525, 36
      %v1007 = vpop.permute.xlu0 %1006
      %1008 = vrot.lane.b32.xlu0 %v526, 36
      %v1009 = vpop.permute.xlu0 %1008
      %1010 = vrot.lane.b32.xlu0 %v527, 36
      %v1011 = vpop.permute.xlu0 %1010
      %1012 = vrot.lane.b32.xlu0 %v528, 36
      %v1013 = vpop.permute.xlu0 %1012
      %1014 = vrot.lane.b32.xlu0 %v529, 36
      %v1015 = vpop.permute.xlu0 %1014
      %1016 = vrot.lane.b32.xlu0 %v530, 36
      %v1017 = vpop.permute.xlu0 %1016
      %1034 = vrot.lane.b32.xlu0 %v824, 48
      %v1035 = vpop.permute.xlu0 %1034
      %1036 = vrot.lane.b32.xlu0 %v825, 48
      %v1037 = vpop.permute.xlu0 %1036
      %1038 = vrot.lane.b32.xlu0 %v826, 48
      %v1039 = vpop.permute.xlu0 %1038
      %1040 = vrot.lane.b32.xlu0 %v827, 48
      %v1041 = vpop.permute.xlu0 %1040
      %1042 = vrot.lane.b32.xlu0 %v828, 48
      %v1043 = vpop.permute.xlu0 %1042
      %1044 = vrot.lane.b32.xlu0 %v829, 48
      %v1045 = vpop.permute.xlu0 %1044
      %1046 = vrot.lane.b32.xlu0 %v830, 48
      %v1047 = vpop.permute.xlu0 %1046
      %1048 = vrot.lane.b32.xlu0 %v831, 48
      %v1049 = vpop.permute.xlu0 %1048
      %1066 = vrot.lane.b32.xlu0 %v873, 60
      %v1067 = vpop.permute.xlu0 %1066
      %1068 = vrot.lane.b32.xlu0 %v874, 60
      %v1069 = vpop.permute.xlu0 %1068
      %1070 = vrot.lane.b32.xlu0 %v875, 60
      %v1071 = vpop.permute.xlu0 %1070
      %1072 = vrot.lane.b32.xlu0 %v876, 60
      %v1073 = vpop.permute.xlu0 %1072
      %1074 = vrot.lane.b32.xlu0 %v877, 60
      %v1075 = vpop.permute.xlu0 %1074
      %1076 = vrot.lane.b32.xlu0 %v878, 60
      %v1077 = vpop.permute.xlu0 %1076
      %1078 = vrot.lane.b32.xlu0 %v879, 60
      %v1079 = vpop.permute.xlu0 %1078
      %1080 = vrot.lane.b32.xlu0 %v880, 60
      %v1081 = vpop.permute.xlu0 %1080
      %1098 = vrot.lane.b32.xlu0 %v922, 72
      %v1099 = vpop.permute.xlu0 %1098
      %1100 = vrot.lane.b32.xlu0 %v923, 72
      %v1101 = vpop.permute.xlu0 %1100
      %1102 = vrot.lane.b32.xlu0 %v924, 72
      %v1103 = vpop.permute.xlu0 %1102
      %1104 = vrot.lane.b32.xlu0 %v925, 72
      %v1105 = vpop.permute.xlu0 %1104
      %1106 = vrot.lane.b32.xlu0 %v926, 72
      %v1107 = vpop.permute.xlu0 %1106
      %1108 = vrot.lane.b32.xlu0 %v927, 72
      %v1109 = vpop.permute.xlu0 %1108
      %1110 = vrot.lane.b32.xlu0 %v928, 72
      %v1111 = vpop.permute.xlu0 %1110
      %1112 = vrot.lane.b32.xlu0 %v929, 72
      %v1113 = vpop.permute.xlu0 %1112
      %vm1122 = vcmask 97280
      %v1123 = vsel %vm1122, %v677, %v939
      %v1124 = vsel %vm1122, %v678, %v941
      %v1125 = vsel %vm1122, %v679, %v943
      %v1126 = vsel %vm1122, %v680, %v945
      %v1127 = vsel %vm1122, %v681, %v947
      %v1128 = vsel %vm1122, %v682, %v949
      %v1129 = vsel %vm1122, %v683, %v951
      %v1130 = vsel %vm1122, %v684, %v953
      %vm1131 = vcmask 195584
      %v1132 = vsel %vm1131, %v1123, %v971
      %v1133 = vsel %vm1131, %v1124, %v973
      %v1134 = vsel %vm1131, %v1125, %v975
      %v1135 = vsel %vm1131, %v1126, %v977
      %v1136 = vsel %vm1131, %v1127, %v979
      %v1137 = vsel %vm1131, %v1128, %v981
      %v1138 = vsel %vm1131, %v1129, %v983
      %v1139 = vsel %vm1131, %v1130, %v985
      %vm1140 = vcmask 293888
      %v1141 = vsel %vm1140, %v1132, %v1003
      %v1142 = vsel %vm1140, %v1133, %v1005
      %v1143 = vsel %vm1140, %v1134, %v1007
      %v1144 = vsel %vm1140, %v1135, %v1009
      %v1145 = vsel %vm1140, %v1136, %v1011
      %v1146 = vsel %vm1140, %v1137, %v1013
      %v1147 = vsel %vm1140, %v1138, %v1015
      %v1148 = vsel %vm1140, %v1139, %v1017
      %vm1149 = vcmask 392192
      %v1150 = vsel %vm1149, %v1141, %v1035
      %v1151 = vsel %vm1149, %v1142, %v1037
      %v1152 = vsel %vm1149, %v1143, %v1039
      %v1153 = vsel %vm1149, %v1144, %v1041
      %v1154 = vsel %vm1149, %v1145, %v1043
      %v1155 = vsel %vm1149, %v1146, %v1045
      %v1156 = vsel %vm1149, %v1147, %v1047
      %v1157 = vsel %vm1149, %v1148, %v1049
      %vm1158 = vcmask 490496
      %v1159 = vsel %vm1158, %v1150, %v1067
      %v1160 = vsel %vm1158, %v1151, %v1069
      %v1161 = vsel %vm1158, %v1152, %v1071
      %v1162 = vsel %vm1158, %v1153, %v1073
      %v1163 = vsel %vm1158, %v1154, %v1075
      %v1164 = vsel %vm1158, %v1155, %v1077
      %v1165 = vsel %vm1158, %v1156, %v1079
      %v1166 = vsel %vm1158, %v1157, %v1081
      %vm1167 = vcmask 588800
      %v1168 = vsel %vm1167, %v1159, %v1099
      %v1169 = vsel %vm1167, %v1160, %v1101
      %v1170 = vsel %vm1167, %v1161, %v1103
      %v1171 = vsel %vm1167, %v1162, %v1105
      %v1172 = vsel %vm1167, %v1163, %v1107
      %v1173 = vsel %vm1167, %v1164, %v1109
      %v1174 = vsel %vm1167, %v1165, %v1111
      %v1175 = vsel %vm1167, %v1166, %v1113
      %v1176 = vld [vmem:[%s4] sm:$0x3]
      %v1178 = vlaneseq
      %v1179 = vshrl.u32 %v1178, 7
      %v1180 = vsub.s32 0, %v1179
      %v1181 = vrot.slane %v1176, %v1180
      %v1182 = vlaneseq
      %v1183 = vshrl.u32 %v1182, 7
      %v1184 = vsub.s32 1, %v1183
      %v1185 = vrot.slane %v1176, %v1184
      %v1188 = vmul.f32 %v267, %v1181
      %v1189 = vmul.f32 %v268, %v1185
      %v1190 = vmul.f32 %v269, %v1181
      %v1191 = vmul.f32 %v270, %v1185
      %v1192 = vmul.f32 %v271, %v1181
      %v1193 = vmul.f32 %v272, %v1185
      %v1194 = vmul.f32 %v273, %v1181
      %v1195 = vmul.f32 %v274, %v1185
      %v1196 = vmul.f32 %v275, %v1181
      %v1197 = vmul.f32 %v276, %v1185
      %v1198 = vmul.f32 %v277, %v1181
      %v1199 = vmul.f32 %v278, %v1185
      %v1200 = vmul.f32 %v279, %v1181
      %v1201 = vmul.f32 %v280, %v1185
      %v1202 = vmul.f32 %v281, %v1181
      %v1203 = vmul.f32 %v282, %v1185
      %v1204 = vld [vmem:[%s5] sm:$0x3]
      %v1206 = vlaneseq
      %v1207 = vshrl.u32 %v1206, 7
      %v1208 = vsub.s32 0, %v1207
      %v1209 = vrot.slane %v1204, %v1208
      %v1210 = vlaneseq
      %v1211 = vshrl.u32 %v1210, 7
      %v1212 = vsub.s32 1, %v1211
      %v1213 = vrot.slane %v1204, %v1212
      %v1216 = vadd.f32 %v1188, %v1209
      %v1217 = vadd.f32 %v1189, %v1213
      %v1218 = vadd.f32 %v1190, %v1209
      %v1219 = vadd.f32 %v1191, %v1213
      %v1220 = vadd.f32 %v1192, %v1209
      %v1221 = vadd.f32 %v1193, %v1213
      %v1222 = vadd.f32 %v1194, %v1209
      %v1223 = vadd.f32 %v1195, %v1213
      %v1224 = vadd.f32 %v1196, %v1209
      %v1225 = vadd.f32 %v1197, %v1213
      %v1226 = vadd.f32 %v1198, %v1209
      %v1227 = vadd.f32 %v1199, %v1213
      %v1228 = vadd.f32 %v1200, %v1209
      %v1229 = vadd.f32 %v1201, %v1213
      %v1230 = vadd.f32 %v1202, %v1209
      %v1231 = vadd.f32 %v1203, %v1213
      %v1232 = vpack.c.bf16 %v1169, %v1168
      %v1233 = vpack.c.bf16 %v1171, %v1170
      %v1234 = vpack.c.bf16 %v1173, %v1172
      %v1235 = vpack.c.bf16 %v1175, %v1174
      %v1236 = vld [vmem:[%s3] sm:$0xff]
      %v1237 = vld [vmem:[%s3 + $0x8] sm:$0xff]
      %v1238 = vld [vmem:[%s3 + $0x10] sm:$0xff]
      %v1239 = vld [vmem:[%s3 + $0x18] sm:$0xff]
      %v1240 = vld [vmem:[%s3 + $0x20] sm:$0xff]
      %v1241 = vld [vmem:[%s3 + $0x28] sm:$0xff]
      %v1242 = vld [vmem:[%s3 + $0x30] sm:$0xff]
      %v1243 = vld [vmem:[%s3 + $0x38] sm:$0xff]
      %v1244 = vld [vmem:[%s3 + $0x40] sm:$0xff]
      %v1245 = vld [vmem:[%s3 + $0x48] sm:$0xff]
      %v1246 = vld [vmem:[%s3 + $0x50] sm:$0x33]
      %v1258 = vunpack.c.l.b16 %v1236
      %v1259 = vunpack.c.h.b16 %v1236
      %v1260 = vunpack.c.l.b16 %v1237
      %v1261 = vunpack.c.h.b16 %v1237
      %v1262 = vunpack.c.l.b16 %v1238
      %v1263 = vunpack.c.h.b16 %v1238
      %v1264 = vunpack.c.l.b16 %v1239
      %v1265 = vunpack.c.h.b16 %v1239
      %v1266 = vunpack.c.l.b16 %v1240
      %v1267 = vunpack.c.h.b16 %v1240
      %v1268 = vunpack.c.l.b16 %v1241
      %v1269 = vunpack.c.h.b16 %v1241
      %v1270 = vunpack.c.l.b16 %v1242
      %v1271 = vunpack.c.h.b16 %v1242
      %v1272 = vunpack.c.l.b16 %v1243
      %v1273 = vunpack.c.h.b16 %v1243
      %v1274 = vunpack.c.l.b16 %v1244
      %v1275 = vunpack.c.h.b16 %v1244
      %v1276 = vunpack.c.l.b16 %v1245
      %v1277 = vunpack.c.h.b16 %v1245
      %v1278 = vunpack.c.l.b16 %v1246
      %v1279 = vunpack.c.h.b16 %v1246
      %v1280 = vpack.c.b16 %v1260, %v1258
      %v1281 = vpack.c.b16 %v1261, %v1259
      %v1282 = vpack.c.b16 %v1264, %v1262
      %v1283 = vpack.c.b16 %v1265, %v1263
      %v1284 = vpack.c.b16 %v1268, %v1266
      %v1285 = vpack.c.b16 %v1269, %v1267
      %v1286 = vpack.c.b16 %v1272, %v1270
      %v1287 = vpack.c.b16 %v1273, %v1271
      %v1288 = vpack.c.b16 %v1276, %v1274
      %v1289 = vpack.c.b16 %v1277, %v1275
      %v1290 = vpack.c.b16 %v1278, %v1278
      %v1291 = vpack.c.b16 %v1279, %v1279
      %vm1302 = vcmask 687104
      %v1304 = vsel %vm1302, %v1232, 0
      %v1307 = vsel %vm1302, %v1233, 0
      %v1310 = vsel %vm1302, %v1234, 0
      %v1313 = vsel %vm1302, %v1235, 0
      %vm1315 = vcmask 1041408
      %v1317 = vsel %vm1315, %v1290, 0
      %v1320 = vsel %vm1315, %v1291, 0
      %1322 = vmatprep.subr.bf16.mxu0 %v1281
      %1323 = vmatpush1.bf16.msra.mxu0 %v1280
      %1324 = vmatprep.subr.bf16.mxu0 %v1283
      %1325 = vmatpush1.bf16.msra.mxu0 %v1282
      %1326 = vmatprep.subr.bf16.mxu0 %v1285
      %1327 = vmatpush1.bf16.msra.mxu0 %v1284
      %1328 = vmatprep.subr.bf16.mxu0 %v1287
      %1329 = vmatpush1.bf16.msra.mxu0 %v1286
      %1330 = vmatprep.subr.bf16.mxu0 %v1289
      %1331 = vmatpush1.bf16.msra.mxu0 %v1288
      %1332 = vmatprep.subr.bf16.mxu0 %v1320
      %1333 = vmatpush1.bf16.msra.mxu0 %v1317
      %1334 = vmatprep.subr.bf16.mxu0 0
      %1335 = vmatpush1.bf16.msra.mxu0 0
      %1336 = vmatprep.subr.bf16.mxu0 0
      %1337 = vmatpush1.bf16.msra.mxu0 0
      %1338 = vmatprep.subr.bf16.mxu0 0
      %1339 = vmatpush1.bf16.msra.mxu0 0
      %1340 = vmatprep.subr.bf16.mxu0 0
      %1341 = vmatpush1.bf16.msra.mxu0 0
      %1342 = vmatprep.subr.bf16.mxu0 0
      %1343 = vmatpush1.bf16.msra.mxu0 0
      %1344 = vmatprep.subr.bf16.mxu0 0
      %1345 = vmatpush1.bf16.msra.mxu0 0
      %1346 = vmatprep.subr.bf16.mxu0 0
      %1347 = vmatpush1.bf16.msra.mxu0 0
      %1348 = vmatprep.subr.bf16.mxu0 0
      %1349 = vmatpush1.bf16.msra.mxu0 0
      %1350 = vmatprep.subr.bf16.mxu0 0
      %1351 = vmatpush1.bf16.msra.mxu0 0
      %1352 = vmatprep.subr.bf16.mxu0 0
      %1353 = vmatpush1.bf16.msra.mxu0 0
      %1354 = vmatprep.mubr.bf16.mxu0 0
      %1355 = vmatmul.mubr.bf16.gmra.mrb[0].mxu0 %v1304
      %v1356 = vpop.f32.mrb[0].mxu0
      %v1357 = vadd.f32 0.0, %v1356
      %v1358 = vpop.f32.mrb[0].mxu0
      %v1359 = vadd.f32 0.0, %v1358
      %v1360 = vpop.f32.mrb[0].mxu0
      %v1361 = vadd.f32 0.0, %v1360
      %v1362 = vpop.f32.mrb[0].mxu0
      %v1363 = vadd.f32 0.0, %v1362
      %1364 = vmatprep.mubr.bf16.mxu0 0
      %1365 = vmatmul.mubr.bf16.gmra.mrb[0].mxu0 %v1307
      %v1366 = vpop.f32.mrb[0].mxu0
      %v1367 = vadd.f32 0.0, %v1366
      %v1368 = vpop.f32.mrb[0].mxu0
      %v1369 = vadd.f32 0.0, %v1368
      %v1370 = vpop.f32.mrb[0].mxu0
      %v1371 = vadd.f32 0.0, %v1370
      %v1372 = vpop.f32.mrb[0].mxu0
      %v1373 = vadd.f32 0.0, %v1372
      %1374 = vmatprep.mubr.bf16.mxu0 0
      %1375 = vmatmul.mubr.bf16.gmra.mrb[0].mxu0 %v1310
      %v1376 = vpop.f32.mrb[0].mxu0
      %v1377 = vadd.f32 0.0, %v1376
      %v1378 = vpop.f32.mrb[0].mxu0
      %v1379 = vadd.f32 0.0, %v1378
      %v1380 = vpop.f32.mrb[0].mxu0
      %v1381 = vadd.f32 0.0, %v1380
      %v1382 = vpop.f32.mrb[0].mxu0
      %v1383 = vadd.f32 0.0, %v1382
      %1384 = vmatprep.mubr.bf16.mxu0 0
      %1385 = vmatmul.mubr.bf16.gmra.mrb[0].mxu0 %v1313
      %v1386 = vpop.f32.mrb[0].mxu0
      %v1387 = vadd.f32 0.0, %v1386
      %v1388 = vpop.f32.mrb[0].mxu0
      %v1389 = vadd.f32 0.0, %v1388
      %v1390 = vpop.f32.mrb[0].mxu0
      %v1391 = vadd.f32 0.0, %v1390
      %v1392 = vpop.f32.mrb[0].mxu0
      %v1393 = vadd.f32 0.0, %v1392
      %1394 = vdwg.mxu0
      %v1395 = vadd.f32 %v1216, %v1357
      %v1396 = vadd.f32 %v1217, %v1359
      %v1397 = vadd.f32 %v1218, %v1361
      %v1398 = vadd.f32 %v1219, %v1363
      %v1399 = vadd.f32 %v1220, %v1367
      %v1400 = vadd.f32 %v1221, %v1369
      %v1401 = vadd.f32 %v1222, %v1371
      %v1402 = vadd.f32 %v1223, %v1373
      %v1403 = vadd.f32 %v1224, %v1377
      %v1404 = vadd.f32 %v1225, %v1379
      %v1405 = vadd.f32 %v1226, %v1381
      %v1406 = vadd.f32 %v1227, %v1383
      %v1407 = vadd.f32 %v1228, %v1387
      %v1408 = vadd.f32 %v1229, %v1389
      %v1409 = vadd.f32 %v1230, %v1391
      %v1410 = vadd.f32 %v1231, %v1393
      %v1411 = vmax.f32 %v1395, 0.0
      %v1412 = vmax.f32 %v1396, 0.0
      %v1413 = vmax.f32 %v1397, 0.0
      %v1414 = vmax.f32 %v1398, 0.0
      %v1415 = vmax.f32 %v1399, 0.0
      %v1416 = vmax.f32 %v1400, 0.0
      %v1417 = vmax.f32 %v1401, 0.0
      %v1418 = vmax.f32 %v1402, 0.0
      %v1419 = vmax.f32 %v1403, 0.0
      %v1420 = vmax.f32 %v1404, 0.0
      %v1421 = vmax.f32 %v1405, 0.0
      %v1422 = vmax.f32 %v1406, 0.0
      %v1423 = vmax.f32 %v1407, 0.0
      %v1424 = vmax.f32 %v1408, 0.0
      %v1425 = vmax.f32 %v1409, 0.0
      %v1426 = vmax.f32 %v1410, 0.0
      %v1427 = vadd.f32 %v1411, %v1413
      %v1428 = vrot.slane %v1427, 4
      %v1429 = vadd.f32 %v1427, %v1428
      %v1430 = vrot.slane %v1429, 2
      %v1431 = vadd.f32 %v1429, %v1430
      %v1432 = vrot.slane %v1431, 1
      %v1433 = vadd.f32 %v1431, %v1432
      %v1434 = vadd.f32 %v1412, %v1414
      %v1435 = vrot.slane %v1434, 4
      %v1436 = vadd.f32 %v1434, %v1435
      %v1437 = vrot.slane %v1436, 2
      %v1438 = vadd.f32 %v1436, %v1437
      %v1439 = vrot.slane %v1438, 1
      %v1440 = vadd.f32 %v1438, %v1439
      %v1441 = vadd.f32 %v1415, %v1417
      %v1442 = vrot.slane %v1441, 4
      %v1443 = vadd.f32 %v1441, %v1442
      %v1444 = vrot.slane %v1443, 2
      %v1445 = vadd.f32 %v1443, %v1444
      %v1446 = vrot.slane %v1445, 1
      %v1447 = vadd.f32 %v1445, %v1446
      %v1448 = vadd.f32 %v1416, %v1418
      %v1449 = vrot.slane %v1448, 4
      %v1450 = vadd.f32 %v1448, %v1449
      %v1451 = vrot.slane %v1450, 2
      %v1452 = vadd.f32 %v1450, %v1451
      %v1453 = vrot.slane %v1452, 1
      %v1454 = vadd.f32 %v1452, %v1453
      %v1455 = vadd.f32 %v1419, %v1421
      %v1456 = vrot.slane %v1455, 4
      %v1457 = vadd.f32 %v1455, %v1456
      %v1458 = vrot.slane %v1457, 2
      %v1459 = vadd.f32 %v1457, %v1458
      %v1460 = vrot.slane %v1459, 1
      %v1461 = vadd.f32 %v1459, %v1460
      %v1462 = vadd.f32 %v1420, %v1422
      %v1463 = vrot.slane %v1462, 4
      %v1464 = vadd.f32 %v1462, %v1463
      %v1465 = vrot.slane %v1464, 2
      %v1466 = vadd.f32 %v1464, %v1465
      %v1467 = vrot.slane %v1466, 1
      %v1468 = vadd.f32 %v1466, %v1467
      %v1469 = vadd.f32 %v1423, %v1425
      %v1470 = vrot.slane %v1469, 4
      %v1471 = vadd.f32 %v1469, %v1470
      %v1472 = vrot.slane %v1471, 2
      %v1473 = vadd.f32 %v1471, %v1472
      %v1474 = vrot.slane %v1473, 1
      %v1475 = vadd.f32 %v1473, %v1474
      %v1476 = vadd.f32 %v1424, %v1426
      %v1477 = vrot.slane %v1476, 4
      %v1478 = vadd.f32 %v1476, %v1477
      %v1479 = vrot.slane %v1478, 2
      %v1480 = vadd.f32 %v1478, %v1479
      %v1481 = vrot.slane %v1480, 1
      %v1482 = vadd.f32 %v1480, %v1481
      %v1483 = vadd.f32 %v1433, 0.0
      %v1484 = vadd.f32 %v1440, 0.0
      %v1485 = vadd.f32 %v1447, 0.0
      %v1486 = vadd.f32 %v1454, 0.0
      %v1487 = vadd.f32 %v1461, 0.0
      %v1488 = vadd.f32 %v1468, 0.0
      %v1489 = vadd.f32 %v1475, 0.0
      %v1490 = vadd.f32 %v1482, 0.0
      %1499 = vrot.lane.b32.xlu0 %v677, 116
      %v1500 = vpop.permute.xlu0 %1499
      %1501 = vrot.lane.b32.xlu0 %v678, 116
      %v1502 = vpop.permute.xlu0 %1501
      %1503 = vrot.lane.b32.xlu0 %v679, 116
      %v1504 = vpop.permute.xlu0 %1503
      %1505 = vrot.lane.b32.xlu0 %v680, 116
      %v1506 = vpop.permute.xlu0 %1505
      %1507 = vrot.lane.b32.xlu0 %v681, 116
      %v1508 = vpop.permute.xlu0 %1507
      %1509 = vrot.lane.b32.xlu0 %v682, 116
      %v1510 = vpop.permute.xlu0 %1509
      %1511 = vrot.lane.b32.xlu0 %v683, 116
      %v1512 = vpop.permute.xlu0 %1511
      %1513 = vrot.lane.b32.xlu0 %v684, 116
      %v1514 = vpop.permute.xlu0 %1513
      %1523 = vrot.lane.b32.xlu0 %v775, 12
      %v1524 = vpop.permute.xlu0 %1523
      %1525 = vrot.lane.b32.xlu0 %v776, 12
      %v1526 = vpop.permute.xlu0 %1525
      %1527 = vrot.lane.b32.xlu0 %v777, 12
      %v1528 = vpop.permute.xlu0 %1527
      %1529 = vrot.lane.b32.xlu0 %v778, 12
      %v1530 = vpop.permute.xlu0 %1529
      %1531 = vrot.lane.b32.xlu0 %v779, 12
      %v1532 = vpop.permute.xlu0 %1531
      %1533 = vrot.lane.b32.xlu0 %v780, 12
      %v1534 = vpop.permute.xlu0 %1533
      %1535 = vrot.lane.b32.xlu0 %v781, 12
      %v1536 = vpop.permute.xlu0 %1535
      %1537 = vrot.lane.b32.xlu0 %v782, 12
      %v1538 = vpop.permute.xlu0 %1537
      %1547 = vrot.lane.b32.xlu0 %v523, 24
      %v1548 = vpop.permute.xlu0 %1547
      %1549 = vrot.lane.b32.xlu0 %v524, 24
      %v1550 = vpop.permute.xlu0 %1549
      %1551 = vrot.lane.b32.xlu0 %v525, 24
      %v1552 = vpop.permute.xlu0 %1551
      %1553 = vrot.lane.b32.xlu0 %v526, 24
      %v1554 = vpop.permute.xlu0 %1553
      %1555 = vrot.lane.b32.xlu0 %v527, 24
      %v1556 = vpop.permute.xlu0 %1555
      %1557 = vrot.lane.b32.xlu0 %v528, 24
      %v1558 = vpop.permute.xlu0 %1557
      %1559 = vrot.lane.b32.xlu0 %v529, 24
      %v1560 = vpop.permute.xlu0 %1559
      %1561 = vrot.lane.b32.xlu0 %v530, 24
      %v1562 = vpop.permute.xlu0 %1561
      %1571 = vrot.lane.b32.xlu0 %v824, 36
      %v1572 = vpop.permute.xlu0 %1571
      %1573 = vrot.lane.b32.xlu0 %v825, 36
      %v1574 = vpop.permute.xlu0 %1573
      %1575 = vrot.lane.b32.xlu0 %v826, 36
      %v1576 = vpop.permute.xlu0 %1575
      %1577 = vrot.lane.b32.xlu0 %v827, 36
      %v1578 = vpop.permute.xlu0 %1577
      %1579 = vrot.lane.b32.xlu0 %v828, 36
      %v1580 = vpop.permute.xlu0 %1579
      %1581 = vrot.lane.b32.xlu0 %v829, 36
      %v1582 = vpop.permute.xlu0 %1581
      %1583 = vrot.lane.b32.xlu0 %v830, 36
      %v1584 = vpop.permute.xlu0 %1583
      %1585 = vrot.lane.b32.xlu0 %v831, 36
      %v1586 = vpop.permute.xlu0 %1585
      %1595 = vrot.lane.b32.xlu0 %v873, 48
      %v1596 = vpop.permute.xlu0 %1595
      %1597 = vrot.lane.b32.xlu0 %v874, 48
      %v1598 = vpop.permute.xlu0 %1597
      %1599 = vrot.lane.b32.xlu0 %v875, 48
      %v1600 = vpop.permute.xlu0 %1599
      %1601 = vrot.lane.b32.xlu0 %v876, 48
      %v1602 = vpop.permute.xlu0 %1601
      %1603 = vrot.lane.b32.xlu0 %v877, 48
      %v1604 = vpop.permute.xlu0 %1603
      %1605 = vrot.lane.b32.xlu0 %v878, 48
      %v1606 = vpop.permute.xlu0 %1605
      %1607 = vrot.lane.b32.xlu0 %v879, 48
      %v1608 = vpop.permute.xlu0 %1607
      %1609 = vrot.lane.b32.xlu0 %v880, 48
      %v1610 = vpop.permute.xlu0 %1609
      %1619 = vrot.lane.b32.xlu0 %v922, 60
      %v1620 = vpop.permute.xlu0 %1619
      %1621 = vrot.lane.b32.xlu0 %v923, 60
      %v1622 = vpop.permute.xlu0 %1621
      %1623 = vrot.lane.b32.xlu0 %v924, 60
      %v1624 = vpop.permute.xlu0 %1623
      %1625 = vrot.lane.b32.xlu0 %v925, 60
      %v1626 = vpop.permute.xlu0 %1625
      %1627 = vrot.lane.b32.xlu0 %v926, 60
      %v1628 = vpop.permute.xlu0 %1627
      %1629 = vrot.lane.b32.xlu0 %v927, 60
      %v1630 = vpop.permute.xlu0 %1629
      %1631 = vrot.lane.b32.xlu0 %v928, 60
      %v1632 = vpop.permute.xlu0 %1631
      %1633 = vrot.lane.b32.xlu0 %v929, 60
      %v1634 = vpop.permute.xlu0 %1633
      %v1643 = vsel %vm1122, %v1500, %v726
      %v1644 = vsel %vm1122, %v1502, %v727
      %v1645 = vsel %vm1122, %v1504, %v728
      %v1646 = vsel %vm1122, %v1506, %v729
      %v1647 = vsel %vm1122, %v1508, %v730
      %v1648 = vsel %vm1122, %v1510, %v731
      %v1649 = vsel %vm1122, %v1512, %v732
      %v1650 = vsel %vm1122, %v1514, %v733
      %v1651 = vsel %vm1131, %v1643, %v1524
      %v1652 = vsel %vm1131, %v1644, %v1526
      %v1653 = vsel %vm1131, %v1645, %v1528
      %v1654 = vsel %vm1131, %v1646, %v1530
      %v1655 = vsel %vm1131, %v1647, %v1532
      %v1656 = vsel %vm1131, %v1648, %v1534
      %v1657 = vsel %vm1131, %v1649, %v1536
      %v1658 = vsel %vm1131, %v1650, %v1538
      %v1659 = vsel %vm1140, %v1651, %v1548
      %v1660 = vsel %vm1140, %v1652, %v1550
      %v1661 = vsel %vm1140, %v1653, %v1552
      %v1662 = vsel %vm1140, %v1654, %v1554
      %v1663 = vsel %vm1140, %v1655, %v1556
      %v1664 = vsel %vm1140, %v1656, %v1558
      %v1665 = vsel %vm1140, %v1657, %v1560
      %v1666 = vsel %vm1140, %v1658, %v1562
      %v1667 = vsel %vm1149, %v1659, %v1572
      %v1668 = vsel %vm1149, %v1660, %v1574
      %v1669 = vsel %vm1149, %v1661, %v1576
      %v1670 = vsel %vm1149, %v1662, %v1578
      %v1671 = vsel %vm1149, %v1663, %v1580
      %v1672 = vsel %vm1149, %v1664, %v1582
      %v1673 = vsel %vm1149, %v1665, %v1584
      %v1674 = vsel %vm1149, %v1666, %v1586
      %v1675 = vsel %vm1158, %v1667, %v1596
      %v1676 = vsel %vm1158, %v1668, %v1598
      %v1677 = vsel %vm1158, %v1669, %v1600
      %v1678 = vsel %vm1158, %v1670, %v1602
      %v1679 = vsel %vm1158, %v1671, %v1604
      %v1680 = vsel %vm1158, %v1672, %v1606
      %v1681 = vsel %vm1158, %v1673, %v1608
      %v1682 = vsel %vm1158, %v1674, %v1610
      %v1683 = vsel %vm1167, %v1675, %v1620
      %v1684 = vsel %vm1167, %v1676, %v1622
      %v1685 = vsel %vm1167, %v1677, %v1624
      %v1686 = vsel %vm1167, %v1678, %v1626
      %v1687 = vsel %vm1167, %v1679, %v1628
      %v1688 = vsel %vm1167, %v1680, %v1630
      %v1689 = vsel %vm1167, %v1681, %v1632
      %v1690 = vsel %vm1167, %v1682, %v1634
      %s1691 = scalar_lea.vmem %s4, 2
      %v1692 = vld [vmem:[%s1691] sm:$0x3]
      %v1694 = vlaneseq
      %v1695 = vshrl.u32 %v1694, 7
      %v1696 = vsub.s32 0, %v1695
      %v1697 = vrot.slane %v1692, %v1696
      %v1698 = vlaneseq
      %v1699 = vshrl.u32 %v1698, 7
      %v1700 = vsub.s32 1, %v1699
      %v1701 = vrot.slane %v1692, %v1700
      %v1704 = vmul.f32 %v267, %v1697
      %v1705 = vmul.f32 %v268, %v1701
      %v1706 = vmul.f32 %v269, %v1697
      %v1707 = vmul.f32 %v270, %v1701
      %v1708 = vmul.f32 %v271, %v1697
      %v1709 = vmul.f32 %v272, %v1701
      %v1710 = vmul.f32 %v273, %v1697
      %v1711 = vmul.f32 %v274, %v1701
      %v1712 = vmul.f32 %v275, %v1697
      %v1713 = vmul.f32 %v276, %v1701
      %v1714 = vmul.f32 %v277, %v1697
      %v1715 = vmul.f32 %v278, %v1701
      %v1716 = vmul.f32 %v279, %v1697
      %v1717 = vmul.f32 %v280, %v1701
      %v1718 = vmul.f32 %v281, %v1697
      %v1719 = vmul.f32 %v282, %v1701
      %s1720 = scalar_lea.vmem %s5, 2
      %v1721 = vld [vmem:[%s1720] sm:$0x3]
      %v1723 = vlaneseq
      %v1724 = vshrl.u32 %v1723, 7
      %v1725 = vsub.s32 0, %v1724
      %v1726 = vrot.slane %v1721, %v1725
      %v1727 = vlaneseq
      %v1728 = vshrl.u32 %v1727, 7
      %v1729 = vsub.s32 1, %v1728
      %v1730 = vrot.slane %v1721, %v1729
      %v1733 = vadd.f32 %v1704, %v1726
      %v1734 = vadd.f32 %v1705, %v1730
      %v1735 = vadd.f32 %v1706, %v1726
      %v1736 = vadd.f32 %v1707, %v1730
      %v1737 = vadd.f32 %v1708, %v1726
      %v1738 = vadd.f32 %v1709, %v1730
      %v1739 = vadd.f32 %v1710, %v1726
      %v1740 = vadd.f32 %v1711, %v1730
      %v1741 = vadd.f32 %v1712, %v1726
      %v1742 = vadd.f32 %v1713, %v1730
      %v1743 = vadd.f32 %v1714, %v1726
      %v1744 = vadd.f32 %v1715, %v1730
      %v1745 = vadd.f32 %v1716, %v1726
      %v1746 = vadd.f32 %v1717, %v1730
      %v1747 = vadd.f32 %v1718, %v1726
      %v1748 = vadd.f32 %v1719, %v1730
      %v1749 = vpack.c.bf16 %v1684, %v1683
      %v1750 = vpack.c.bf16 %v1686, %v1685
      %v1751 = vpack.c.bf16 %v1688, %v1687
      %v1752 = vpack.c.bf16 %v1690, %v1689
      %s1753 = scalar_lea.vmem %s3, 88
      %v1754 = vld [vmem:[%s1753] sm:$0xff]
      %v1755 = vld [vmem:[%s1753 + $0x8] sm:$0xff]
      %v1756 = vld [vmem:[%s1753 + $0x10] sm:$0xff]
      %v1757 = vld [vmem:[%s1753 + $0x18] sm:$0xff]
      %v1758 = vld [vmem:[%s1753 + $0x20] sm:$0xff]
      %v1759 = vld [vmem:[%s1753 + $0x28] sm:$0xff]
      %v1760 = vld [vmem:[%s1753 + $0x30] sm:$0xff]
      %v1761 = vld [vmem:[%s1753 + $0x38] sm:$0xff]
      %v1762 = vld [vmem:[%s1753 + $0x40] sm:$0xff]
      %v1763 = vld [vmem:[%s1753 + $0x48] sm:$0xff]
      %v1764 = vld [vmem:[%s1753 + $0x50] sm:$0x33]
      %v1776 = vunpack.c.l.b16 %v1754
      %v1777 = vunpack.c.h.b16 %v1754
      %v1778 = vunpack.c.l.b16 %v1755
      %v1779 = vunpack.c.h.b16 %v1755
      %v1780 = vunpack.c.l.b16 %v1756
      %v1781 = vunpack.c.h.b16 %v1756
      %v1782 = vunpack.c.l.b16 %v1757
      %v1783 = vunpack.c.h.b16 %v1757
      %v1784 = vunpack.c.l.b16 %v1758
      %v1785 = vunpack.c.h.b16 %v1758
      %v1786 = vunpack.c.l.b16 %v1759
      %v1787 = vunpack.c.h.b16 %v1759
      %v1788 = vunpack.c.l.b16 %v1760
      %v1789 = vunpack.c.h.b16 %v1760
      %v1790 = vunpack.c.l.b16 %v1761
      %v1791 = vunpack.c.h.b16 %v1761
      %v1792 = vunpack.c.l.b16 %v1762
      %v1793 = vunpack.c.h.b16 %v1762
      %v1794 = vunpack.c.l.b16 %v1763
      %v1795 = vunpack.c.h.b16 %v1763
      %v1796 = vunpack.c.l.b16 %v1764
      %v1797 = vunpack.c.h.b16 %v1764
      %v1798 = vpack.c.b16 %v1778, %v1776
      %v1799 = vpack.c.b16 %v1779, %v1777
      %v1800 = vpack.c.b16 %v1782, %v1780
      %v1801 = vpack.c.b16 %v1783, %v1781
      %v1802 = vpack.c.b16 %v1786, %v1784
      %v1803 = vpack.c.b16 %v1787, %v1785
      %v1804 = vpack.c.b16 %v1790, %v1788
      %v1805 = vpack.c.b16 %v1791, %v1789
      %v1806 = vpack.c.b16 %v1794, %v1792
      %v1807 = vpack.c.b16 %v1795, %v1793
      %v1808 = vpack.c.b16 %v1796, %v1796
      %v1809 = vpack.c.b16 %v1797, %v1797
      %v1821 = vsel %vm1302, %v1749, 0
      %v1824 = vsel %vm1302, %v1750, 0
      %v1827 = vsel %vm1302, %v1751, 0
      %v1830 = vsel %vm1302, %v1752, 0
      %v1833 = vsel %vm1315, %v1808, 0
      %v1836 = vsel %vm1315, %v1809, 0
      %1838 = vmatprep.subr.bf16.mxu0 %v1799
      %1839 = vmatpush1.bf16.msra.mxu0 %v1798
      %1840 = vmatprep.subr.bf16.mxu0 %v1801
      %1841 = vmatpush1.bf16.msra.mxu0 %v1800
      %1842 = vmatprep.subr.bf16.mxu0 %v1803
      %1843 = vmatpush1.bf16.msra.mxu0 %v1802
      %1844 = vmatprep.subr.bf16.mxu0 %v1805
      %1845 = vmatpush1.bf16.msra.mxu0 %v1804
      %1846 = vmatprep.subr.bf16.mxu0 %v1807
      %1847 = vmatpush1.bf16.msra.mxu0 %v1806
      %1848 = vmatprep.subr.bf16.mxu0 %v1836
      %1849 = vmatpush1.bf16.msra.mxu0 %v1833
      %1850 = vmatprep.subr.bf16.mxu0 0
      %1851 = vmatpush1.bf16.msra.mxu0 0
      %1852 = vmatprep.subr.bf16.mxu0 0
      %1853 = vmatpush1.bf16.msra.mxu0 0
      %1854 = vmatprep.subr.bf16.mxu0 0
      %1855 = vmatpush1.bf16.msra.mxu0 0
      %1856 = vmatprep.subr.bf16.mxu0 0
      %1857 = vmatpush1.bf16.msra.mxu0 0
      %1858 = vmatprep.subr.bf16.mxu0 0
      %1859 = vmatpush1.bf16.msra.mxu0 0
      %1860 = vmatprep.subr.bf16.mxu0 0
      %1861 = vmatpush1.bf16.msra.mxu0 0
      %1862 = vmatprep.subr.bf16.mxu0 0
      %1863 = vmatpush1.bf16.msra.mxu0 0
      %1864 = vmatprep.subr.bf16.mxu0 0
      %1865 = vmatpush1.bf16.msra.mxu0 0
      %1866 = vmatprep.subr.bf16.mxu0 0
      %1867 = vmatpush1.bf16.msra.mxu0 0
      %1868 = vmatprep.subr.bf16.mxu0 0
      %1869 = vmatpush1.bf16.msra.mxu0 0
      %1870 = vmatprep.mubr.bf16.mxu0 0
      %1871 = vmatmul.mubr.bf16.gmra.mrb[0].mxu0 %v1821
      %v1872 = vpop.f32.mrb[0].mxu0
      %v1873 = vadd.f32 0.0, %v1872
      %v1874 = vpop.f32.mrb[0].mxu0
      %v1875 = vadd.f32 0.0, %v1874
      %v1876 = vpop.f32.mrb[0].mxu0
      %v1877 = vadd.f32 0.0, %v1876
      %v1878 = vpop.f32.mrb[0].mxu0
      %v1879 = vadd.f32 0.0, %v1878
      %1880 = vmatprep.mubr.bf16.mxu0 0
      %1881 = vmatmul.mubr.bf16.gmra.mrb[0].mxu0 %v1824
      %v1882 = vpop.f32.mrb[0].mxu0
      %v1883 = vadd.f32 0.0, %v1882
      %v1884 = vpop.f32.mrb[0].mxu0
      %v1885 = vadd.f32 0.0, %v1884
      %v1886 = vpop.f32.mrb[0].mxu0
      %v1887 = vadd.f32 0.0, %v1886
      %v1888 = vpop.f32.mrb[0].mxu0
      %v1889 = vadd.f32 0.0, %v1888
      %1890 = vmatprep.mubr.bf16.mxu0 0
      %1891 = vmatmul.mubr.bf16.gmra.mrb[0].mxu0 %v1827
      %v1892 = vpop.f32.mrb[0].mxu0
      %v1893 = vadd.f32 0.0, %v1892
      %v1894 = vpop.f32.mrb[0].mxu0
      %v1895 = vadd.f32 0.0, %v1894
      %v1896 = vpop.f32.mrb[0].mxu0
      %v1897 = vadd.f32 0.0, %v1896
      %v1898 = vpop.f32.mrb[0].mxu0
      %v1899 = vadd.f32 0.0, %v1898
      %1900 = vmatprep.mubr.bf16.mxu0 0
      %1901 = vmatmul.mubr.bf16.gmra.mrb[0].mxu0 %v1830
      %v1902 = vpop.f32.mrb[0].mxu0
      %v1903 = vadd.f32 0.0, %v1902
      %v1904 = vpop.f32.mrb[0].mxu0
      %v1905 = vadd.f32 0.0, %v1904
      %v1906 = vpop.f32.mrb[0].mxu0
      %v1907 = vadd.f32 0.0, %v1906
      %v1908 = vpop.f32.mrb[0].mxu0
      %v1909 = vadd.f32 0.0, %v1908
      %1910 = vdwg.mxu0
      %v1911 = vadd.f32 %v1733, %v1873
      %v1912 = vadd.f32 %v1734, %v1875
      %v1913 = vadd.f32 %v1735, %v1877
      %v1914 = vadd.f32 %v1736, %v1879
      %v1915 = vadd.f32 %v1737, %v1883
      %v1916 = vadd.f32 %v1738, %v1885
      %v1917 = vadd.f32 %v1739, %v1887
      %v1918 = vadd.f32 %v1740, %v1889
      %v1919 = vadd.f32 %v1741, %v1893
      %v1920 = vadd.f32 %v1742, %v1895
      %v1921 = vadd.f32 %v1743, %v1897
      %v1922 = vadd.f32 %v1744, %v1899
      %v1923 = vadd.f32 %v1745, %v1903
      %v1924 = vadd.f32 %v1746, %v1905
      %v1925 = vadd.f32 %v1747, %v1907
      %v1926 = vadd.f32 %v1748, %v1909
      %v1927 = vmax.f32 %v1911, 0.0
      %v1928 = vmax.f32 %v1912, 0.0
      %v1929 = vmax.f32 %v1913, 0.0
      %v1930 = vmax.f32 %v1914, 0.0
      %v1931 = vmax.f32 %v1915, 0.0
      %v1932 = vmax.f32 %v1916, 0.0
      %v1933 = vmax.f32 %v1917, 0.0
      %v1934 = vmax.f32 %v1918, 0.0
      %v1935 = vmax.f32 %v1919, 0.0
      %v1936 = vmax.f32 %v1920, 0.0
      %v1937 = vmax.f32 %v1921, 0.0
      %v1938 = vmax.f32 %v1922, 0.0
      %v1939 = vmax.f32 %v1923, 0.0
      %v1940 = vmax.f32 %v1924, 0.0
      %v1941 = vmax.f32 %v1925, 0.0
      %v1942 = vmax.f32 %v1926, 0.0
      %v1943 = vadd.f32 %v1927, %v1929
      %v1944 = vrot.slane %v1943, 4
      %v1945 = vadd.f32 %v1943, %v1944
      %v1946 = vrot.slane %v1945, 2
      %v1947 = vadd.f32 %v1945, %v1946
      %v1948 = vrot.slane %v1947, 1
      %v1949 = vadd.f32 %v1947, %v1948
      %v1950 = vadd.f32 %v1928, %v1930
      %v1951 = vrot.slane %v1950, 4
      %v1952 = vadd.f32 %v1950, %v1951
      %v1953 = vrot.slane %v1952, 2
      %v1954 = vadd.f32 %v1952, %v1953
      %v1955 = vrot.slane %v1954, 1
      %v1956 = vadd.f32 %v1954, %v1955
      %v1957 = vadd.f32 %v1931, %v1933
      %v1958 = vrot.slane %v1957, 4
      %v1959 = vadd.f32 %v1957, %v1958
      %v1960 = vrot.slane %v1959, 2
      %v1961 = vadd.f32 %v1959, %v1960
      %v1962 = vrot.slane %v1961, 1
      %v1963 = vadd.f32 %v1961, %v1962
      %v1964 = vadd.f32 %v1932, %v1934
      %v1965 = vrot.slane %v1964, 4
      %v1966 = vadd.f32 %v1964, %v1965
      %v1967 = vrot.slane %v1966, 2
      %v1968 = vadd.f32 %v1966, %v1967
      %v1969 = vrot.slane %v1968, 1
      %v1970 = vadd.f32 %v1968, %v1969
      %v1971 = vadd.f32 %v1935, %v1937
      %v1972 = vrot.slane %v1971, 4
      %v1973 = vadd.f32 %v1971, %v1972
      %v1974 = vrot.slane %v1973, 2
      %v1975 = vadd.f32 %v1973, %v1974
      %v1976 = vrot.slane %v1975, 1
      %v1977 = vadd.f32 %v1975, %v1976
      %v1978 = vadd.f32 %v1936, %v1938
      %v1979 = vrot.slane %v1978, 4
      %v1980 = vadd.f32 %v1978, %v1979
      %v1981 = vrot.slane %v1980, 2
      %v1982 = vadd.f32 %v1980, %v1981
      %v1983 = vrot.slane %v1982, 1
      %v1984 = vadd.f32 %v1982, %v1983
      %v1985 = vadd.f32 %v1939, %v1941
      %v1986 = vrot.slane %v1985, 4
      %v1987 = vadd.f32 %v1985, %v1986
      %v1988 = vrot.slane %v1987, 2
      %v1989 = vadd.f32 %v1987, %v1988
      %v1990 = vrot.slane %v1989, 1
      %v1991 = vadd.f32 %v1989, %v1990
      %v1992 = vadd.f32 %v1940, %v1942
      %v1993 = vrot.slane %v1992, 4
      %v1994 = vadd.f32 %v1992, %v1993
      %v1995 = vrot.slane %v1994, 2
      %v1996 = vadd.f32 %v1994, %v1995
      %v1997 = vrot.slane %v1996, 1
      %v1998 = vadd.f32 %v1996, %v1997
      %v1999 = vadd.f32 %v1483, %v1949
      %v2000 = vadd.f32 %v1484, %v1956
      %v2001 = vadd.f32 %v1485, %v1963
      %v2002 = vadd.f32 %v1486, %v1970
      %v2003 = vadd.f32 %v1487, %v1977
      %v2004 = vadd.f32 %v1488, %v1984
      %v2005 = vadd.f32 %v1489, %v1991
      %v2006 = vadd.f32 %v1490, %v1998
      %2007 = vrot.lane.b32.xlu0 %v677, 104
      %v2008 = vpop.permute.xlu0 %2007
      %2009 = vrot.lane.b32.xlu0 %v678, 104
      %v2010 = vpop.permute.xlu0 %2009
      %2011 = vrot.lane.b32.xlu0 %v679, 104
      %v2012 = vpop.permute.xlu0 %2011
      %2013 = vrot.lane.b32.xlu0 %v680, 104
      %v2014 = vpop.permute.xlu0 %2013
      %2015 = vrot.lane.b32.xlu0 %v681, 104
      %v2016 = vpop.permute.xlu0 %2015
      %2017 = vrot.lane.b32.xlu0 %v682, 104
      %v2018 = vpop.permute.xlu0 %2017
      %2019 = vrot.lane.b32.xlu0 %v683, 104
      %v2020 = vpop.permute.xlu0 %2019
      %2021 = vrot.lane.b32.xlu0 %v684, 104
      %v2022 = vpop.permute.xlu0 %2021
      %2031 = vrot.lane.b32.xlu0 %v726, 116
      %v2032 = vpop.permute.xlu0 %2031
      %2033 = vrot.lane.b32.xlu0 %v727, 116
      %v2034 = vpop.permute.xlu0 %2033
      %2035 = vrot.lane.b32.xlu0 %v728, 116
      %v2036 = vpop.permute.xlu0 %2035
      %2037 = vrot.lane.b32.xlu0 %v729, 116
      %v2038 = vpop.permute.xlu0 %2037
      %2039 = vrot.lane.b32.xlu0 %v730, 116
      %v2040 = vpop.permute.xlu0 %2039
      %2041 = vrot.lane.b32.xlu0 %v731, 116
      %v2042 = vpop.permute.xlu0 %2041
      %2043 = vrot.lane.b32.xlu0 %v732, 116
      %v2044 = vpop.permute.xlu0 %2043
      %2045 = vrot.lane.b32.xlu0 %v733, 116
      %v2046 = vpop.permute.xlu0 %2045
      %2055 = vrot.lane.b32.xlu0 %v523, 12
      %v2056 = vpop.permute.xlu0 %2055
      %2057 = vrot.lane.b32.xlu0 %v524, 12
      %v2058 = vpop.permute.xlu0 %2057
      %2059 = vrot.lane.b32.xlu0 %v525, 12
      %v2060 = vpop.permute.xlu0 %2059
      %2061 = vrot.lane.b32.xlu0 %v526, 12
      %v2062 = vpop.permute.xlu0 %2061
      %2063 = vrot.lane.b32.xlu0 %v527, 12
      %v2064 = vpop.permute.xlu0 %2063
      %2065 = vrot.lane.b32.xlu0 %v528, 12
      %v2066 = vpop.permute.xlu0 %2065
      %2067 = vrot.lane.b32.xlu0 %v529, 12
      %v2068 = vpop.permute.xlu0 %2067
      %2069 = vrot.lane.b32.xlu0 %v530, 12
      %v2070 = vpop.permute.xlu0 %2069
      %2079 = vrot.lane.b32.xlu0 %v824, 24
      %v2080 = vpop.permute.xlu0 %2079
      %2081 = vrot.lane.b32.xlu0 %v825, 24
      %v2082 = vpop.permute.xlu0 %2081
      %2083 = vrot.lane.b32.xlu0 %v826, 24
      %v2084 = vpop.permute.xlu0 %2083
      %2085 = vrot.lane.b32.xlu0 %v827, 24
      %v2086 = vpop.permute.xlu0 %2085
      %2087 = vrot.lane.b32.xlu0 %v828, 24
      %v2088 = vpop.permute.xlu0 %2087
      %2089 = vrot.lane.b32.xlu0 %v829, 24
      %v2090 = vpop.permute.xlu0 %2089
      %2091 = vrot.lane.b32.xlu0 %v830, 24
      %v2092 = vpop.permute.xlu0 %2091
      %2093 = vrot.lane.b32.xlu0 %v831, 24
      %v2094 = vpop.permute.xlu0 %2093
      %2103 = vrot.lane.b32.xlu0 %v873, 36
      %v2104 = vpop.permute.xlu0 %2103
      %2105 = vrot.lane.b32.xlu0 %v874, 36
      %v2106 = vpop.permute.xlu0 %2105
      %2107 = vrot.lane.b32.xlu0 %v875, 36
      %v2108 = vpop.permute.xlu0 %2107
      %2109 = vrot.lane.b32.xlu0 %v876, 36
      %v2110 = vpop.permute.xlu0 %2109
      %2111 = vrot.lane.b32.xlu0 %v877, 36
      %v2112 = vpop.permute.xlu0 %2111
      %2113 = vrot.lane.b32.xlu0 %v878, 36
      %v2114 = vpop.permute.xlu0 %2113
      %2115 = vrot.lane.b32.xlu0 %v879, 36
      %v2116 = vpop.permute.xlu0 %2115
      %2117 = vrot.lane.b32.xlu0 %v880, 36
      %v2118 = vpop.permute.xlu0 %2117
      %2127 = vrot.lane.b32.xlu0 %v922, 48
      %v2128 = vpop.permute.xlu0 %2127
      %2129 = vrot.lane.b32.xlu0 %v923, 48
      %v2130 = vpop.permute.xlu0 %2129
      %2131 = vrot.lane.b32.xlu0 %v924, 48
      %v2132 = vpop.permute.xlu0 %2131
      %2133 = vrot.lane.b32.xlu0 %v925, 48
      %v2134 = vpop.permute.xlu0 %2133
      %2135 = vrot.lane.b32.xlu0 %v926, 48
      %v2136 = vpop.permute.xlu0 %2135
      %2137 = vrot.lane.b32.xlu0 %v927, 48
      %v2138 = vpop.permute.xlu0 %2137
      %2139 = vrot.lane.b32.xlu0 %v928, 48
      %v2140 = vpop.permute.xlu0 %2139
      %2141 = vrot.lane.b32.xlu0 %v929, 48
      %v2142 = vpop.permute.xlu0 %2141
      %v2151 = vsel %vm1122, %v2008, %v2032
      %v2152 = vsel %vm1122, %v2010, %v2034
      %v2153 = vsel %vm1122, %v2012, %v2036
      %v2154 = vsel %vm1122, %v2014, %v2038
      %v2155 = vsel %vm1122, %v2016, %v2040
      %v2156 = vsel %vm1122, %v2018, %v2042
      %v2157 = vsel %vm1122, %v2020, %v2044
      %v2158 = vsel %vm1122, %v2022, %v2046
      %v2159 = vsel %vm1131, %v2151, %v775
      %v2160 = vsel %vm1131, %v2152, %v776
      %v2161 = vsel %vm1131, %v2153, %v777
      %v2162 = vsel %vm1131, %v2154, %v778
      %v2163 = vsel %vm1131, %v2155, %v779
      %v2164 = vsel %vm1131, %v2156, %v780
      %v2165 = vsel %vm1131, %v2157, %v781
      %v2166 = vsel %vm1131, %v2158, %v782
      %v2167 = vsel %vm1140, %v2159, %v2056
      %v2168 = vsel %vm1140, %v2160, %v2058
      %v2169 = vsel %vm1140, %v2161, %v2060
      %v2170 = vsel %vm1140, %v2162, %v2062
      %v2171 = vsel %vm1140, %v2163, %v2064
      %v2172 = vsel %vm1140, %v2164, %v2066
      %v2173 = vsel %vm1140, %v2165, %v2068
      %v2174 = vsel %vm1140, %v2166, %v2070
      %v2175 = vsel %vm1149, %v2167, %v2080
      %v2176 = vsel %vm1149, %v2168, %v2082
      %v2177 = vsel %vm1149, %v2169, %v2084
      %v2178 = vsel %vm1149, %v2170, %v2086
      %v2179 = vsel %vm1149, %v2171, %v2088
      %v2180 = vsel %vm1149, %v2172, %v2090
      %v2181 = vsel %vm1149, %v2173, %v2092
      %v2182 = vsel %vm1149, %v2174, %v2094
      %v2183 = vsel %vm1158, %v2175, %v2104
      %v2184 = vsel %vm1158, %v2176, %v2106
      %v2185 = vsel %vm1158, %v2177, %v2108
      %v2186 = vsel %vm1158, %v2178, %v2110
      %v2187 = vsel %vm1158, %v2179, %v2112
      %v2188 = vsel %vm1158, %v2180, %v2114
      %v2189 = vsel %vm1158, %v2181, %v2116
      %v2190 = vsel %vm1158, %v2182, %v2118
      %v2191 = vsel %vm1167, %v2183, %v2128
      %v2192 = vsel %vm1167, %v2184, %v2130
      %v2193 = vsel %vm1167, %v2185, %v2132
      %v2194 = vsel %vm1167, %v2186, %v2134
      %v2195 = vsel %vm1167, %v2187, %v2136
      %v2196 = vsel %vm1167, %v2188, %v2138
      %v2197 = vsel %vm1167, %v2189, %v2140
      %v2198 = vsel %vm1167, %v2190, %v2142
      %s2199 = scalar_lea.vmem %s4, 4
      %v2200 = vld [vmem:[%s2199] sm:$0x3]
      %v2202 = vlaneseq
      %v2203 = vshrl.u32 %v2202, 7
      %v2204 = vsub.s32 0, %v2203
      %v2205 = vrot.slane %v2200, %v2204
      %v2206 = vlaneseq
      %v2207 = vshrl.u32 %v2206, 7
      %v2208 = vsub.s32 1, %v2207
      %v2209 = vrot.slane %v2200, %v2208
      %v2212 = vmul.f32 %v267, %v2205
      %v2213 = vmul.f32 %v268, %v2209
      %v2214 = vmul.f32 %v269, %v2205
      %v2215 = vmul.f32 %v270, %v2209
      %v2216 = vmul.f32 %v271, %v2205
      %v2217 = vmul.f32 %v272, %v2209
      %v2218 = vmul.f32 %v273, %v2205
      %v2219 = vmul.f32 %v274, %v2209
      %v2220 = vmul.f32 %v275, %v2205
      %v2221 = vmul.f32 %v276, %v2209
      %v2222 = vmul.f32 %v277, %v2205
      %v2223 = vmul.f32 %v278, %v2209
      %v2224 = vmul.f32 %v279, %v2205
      %v2225 = vmul.f32 %v280, %v2209
      %v2226 = vmul.f32 %v281, %v2205
      %v2227 = vmul.f32 %v282, %v2209
      %s2228 = scalar_lea.vmem %s5, 4
      %v2229 = vld [vmem:[%s2228] sm:$0x3]
      %v2231 = vlaneseq
      %v2232 = vshrl.u32 %v2231, 7
      %v2233 = vsub.s32 0, %v2232
      %v2234 = vrot.slane %v2229, %v2233
      %v2235 = vlaneseq
      %v2236 = vshrl.u32 %v2235, 7
      %v2237 = vsub.s32 1, %v2236
      %v2238 = vrot.slane %v2229, %v2237
      %v2241 = vadd.f32 %v2212, %v2234
      %v2242 = vadd.f32 %v2213, %v2238
      %v2243 = vadd.f32 %v2214, %v2234
      %v2244 = vadd.f32 %v2215, %v2238
      %v2245 = vadd.f32 %v2216, %v2234
      %v2246 = vadd.f32 %v2217, %v2238
      %v2247 = vadd.f32 %v2218, %v2234
      %v2248 = vadd.f32 %v2219, %v2238
      %v2249 = vadd.f32 %v2220, %v2234
      %v2250 = vadd.f32 %v2221, %v2238
      %v2251 = vadd.f32 %v2222, %v2234
      %v2252 = vadd.f32 %v2223, %v2238
      %v2253 = vadd.f32 %v2224, %v2234
      %v2254 = vadd.f32 %v2225, %v2238
      %v2255 = vadd.f32 %v2226, %v2234
      %v2256 = vadd.f32 %v2227, %v2238
      %v2257 = vpack.c.bf16 %v2192, %v2191
      %v2258 = vpack.c.bf16 %v2194, %v2193
      %v2259 = vpack.c.bf16 %v2196, %v2195
      %v2260 = vpack.c.bf16 %v2198, %v2197
      %s2261 = scalar_lea.vmem %s3, 176
      %v2262 = vld [vmem:[%s2261] sm:$0xff]
      %v2263 = vld [vmem:[%s2261 + $0x8] sm:$0xff]
      %v2264 = vld [vmem:[%s2261 + $0x10] sm:$0xff]
      %v2265 = vld [vmem:[%s2261 + $0x18] sm:$0xff]
      %v2266 = vld [vmem:[%s2261 + $0x20] sm:$0xff]
      %v2267 = vld [vmem:[%s2261 + $0x28] sm:$0xff]
      %v2268 = vld [vmem:[%s2261 + $0x30] sm:$0xff]
      %v2269 = vld [vmem:[%s2261 + $0x38] sm:$0xff]
      %v2270 = vld [vmem:[%s2261 + $0x40] sm:$0xff]
      %v2271 = vld [vmem:[%s2261 + $0x48] sm:$0xff]
      %v2272 = vld [vmem:[%s2261 + $0x50] sm:$0x33]
      %v2284 = vunpack.c.l.b16 %v2262
      %v2285 = vunpack.c.h.b16 %v2262
      %v2286 = vunpack.c.l.b16 %v2263
      %v2287 = vunpack.c.h.b16 %v2263
      %v2288 = vunpack.c.l.b16 %v2264
      %v2289 = vunpack.c.h.b16 %v2264
      %v2290 = vunpack.c.l.b16 %v2265
      %v2291 = vunpack.c.h.b16 %v2265
      %v2292 = vunpack.c.l.b16 %v2266
      %v2293 = vunpack.c.h.b16 %v2266
      %v2294 = vunpack.c.l.b16 %v2267
      %v2295 = vunpack.c.h.b16 %v2267
      %v2296 = vunpack.c.l.b16 %v2268
      %v2297 = vunpack.c.h.b16 %v2268
      %v2298 = vunpack.c.l.b16 %v2269
      %v2299 = vunpack.c.h.b16 %v2269
      %v2300 = vunpack.c.l.b16 %v2270
      %v2301 = vunpack.c.h.b16 %v2270
      %v2302 = vunpack.c.l.b16 %v2271
      %v2303 = vunpack.c.h.b16 %v2271
      %v2304 = vunpack.c.l.b16 %v2272
      %v2305 = vunpack.c.h.b16 %v2272
      %v2306 = vpack.c.b16 %v2286, %v2284
      %v2307 = vpack.c.b16 %v2287, %v2285
      %v2308 = vpack.c.b16 %v2290, %v2288
      %v2309 = vpack.c.b16 %v2291, %v2289
      %v2310 = vpack.c.b16 %v2294, %v2292
      %v2311 = vpack.c.b16 %v2295, %v2293
      %v2312 = vpack.c.b16 %v2298, %v2296
      %v2313 = vpack.c.b16 %v2299, %v2297
      %v2314 = vpack.c.b16 %v2302, %v2300
      %v2315 = vpack.c.b16 %v2303, %v2301
      %v2316 = vpack.c.b16 %v2304, %v2304
      %v2317 = vpack.c.b16 %v2305, %v2305
      %v2329 = vsel %vm1302, %v2257, 0
      %v2332 = vsel %vm1302, %v2258, 0
      %v2335 = vsel %vm1302, %v2259, 0
      %v2338 = vsel %vm1302, %v2260, 0
      %v2341 = vsel %vm1315, %v2316, 0
      %v2344 = vsel %vm1315, %v2317, 0
      %2346 = vmatprep.subr.bf16.mxu0 %v2307
      %2347 = vmatpush1.bf16.msra.mxu0 %v2306
      %2348 = vmatprep.subr.bf16.mxu0 %v2309
      %2349 = vmatpush1.bf16.msra.mxu0 %v2308
      %2350 = vmatprep.subr.bf16.mxu0 %v2311
      %2351 = vmatpush1.bf16.msra.mxu0 %v2310
      %2352 = vmatprep.subr.bf16.mxu0 %v2313
      %2353 = vmatpush1.bf16.msra.mxu0 %v2312
      %2354 = vmatprep.subr.bf16.mxu0 %v2315
      %2355 = vmatpush1.bf16.msra.mxu0 %v2314
      %2356 = vmatprep.subr.bf16.mxu0 %v2344
      %2357 = vmatpush1.bf16.msra.mxu0 %v2341
      %2358 = vmatprep.subr.bf16.mxu0 0
      %2359 = vmatpush1.bf16.msra.mxu0 0
      %2360 = vmatprep.subr.bf16.mxu0 0
      %2361 = vmatpush1.bf16.msra.mxu0 0
      %2362 = vmatprep.subr.bf16.mxu0 0
      %2363 = vmatpush1.bf16.msra.mxu0 0
      %2364 = vmatprep.subr.bf16.mxu0 0
      %2365 = vmatpush1.bf16.msra.mxu0 0
      %2366 = vmatprep.subr.bf16.mxu0 0
      %2367 = vmatpush1.bf16.msra.mxu0 0
      %2368 = vmatprep.subr.bf16.mxu0 0
      %2369 = vmatpush1.bf16.msra.mxu0 0
      %2370 = vmatprep.subr.bf16.mxu0 0
      %2371 = vmatpush1.bf16.msra.mxu0 0
      %2372 = vmatprep.subr.bf16.mxu0 0
      %2373 = vmatpush1.bf16.msra.mxu0 0
      %2374 = vmatprep.subr.bf16.mxu0 0
      %2375 = vmatpush1.bf16.msra.mxu0 0
      %2376 = vmatprep.subr.bf16.mxu0 0
      %2377 = vmatpush1.bf16.msra.mxu0 0
      %2378 = vmatprep.mubr.bf16.mxu0 0
      %2379 = vmatmul.mubr.bf16.gmra.mrb[0].mxu0 %v2329
      %v2380 = vpop.f32.mrb[0].mxu0
      %v2381 = vadd.f32 0.0, %v2380
      %v2382 = vpop.f32.mrb[0].mxu0
      %v2383 = vadd.f32 0.0, %v2382
      %v2384 = vpop.f32.mrb[0].mxu0
      %v2385 = vadd.f32 0.0, %v2384
      %v2386 = vpop.f32.mrb[0].mxu0
      %v2387 = vadd.f32 0.0, %v2386
      %2388 = vmatprep.mubr.bf16.mxu0 0
      %2389 = vmatmul.mubr.bf16.gmra.mrb[0].mxu0 %v2332
      %v2390 = vpop.f32.mrb[0].mxu0
      %v2391 = vadd.f32 0.0, %v2390
      %v2392 = vpop.f32.mrb[0].mxu0
      %v2393 = vadd.f32 0.0, %v2392
      %v2394 = vpop.f32.mrb[0].mxu0
      %v2395 = vadd.f32 0.0, %v2394
      %v2396 = vpop.f32.mrb[0].mxu0
      %v2397 = vadd.f32 0.0, %v2396
      %2398 = vmatprep.mubr.bf16.mxu0 0
      %2399 = vmatmul.mubr.bf16.gmra.mrb[0].mxu0 %v2335
      %v2400 = vpop.f32.mrb[0].mxu0
      %v2401 = vadd.f32 0.0, %v2400
      %v2402 = vpop.f32.mrb[0].mxu0
      %v2403 = vadd.f32 0.0, %v2402
      %v2404 = vpop.f32.mrb[0].mxu0
      %v2405 = vadd.f32 0.0, %v2404
      %v2406 = vpop.f32.mrb[0].mxu0
      %v2407 = vadd.f32 0.0, %v2406
      %2408 = vmatprep.mubr.bf16.mxu0 0
      %2409 = vmatmul.mubr.bf16.gmra.mrb[0].mxu0 %v2338
      %v2410 = vpop.f32.mrb[0].mxu0
      %v2411 = vadd.f32 0.0, %v2410
      %v2412 = vpop.f32.mrb[0].mxu0
      %v2413 = vadd.f32 0.0, %v2412
      %v2414 = vpop.f32.mrb[0].mxu0
      %v2415 = vadd.f32 0.0, %v2414
      %v2416 = vpop.f32.mrb[0].mxu0
      %v2417 = vadd.f32 0.0, %v2416
      %2418 = vdwg.mxu0
      %v2419 = vadd.f32 %v2241, %v2381
      %v2420 = vadd.f32 %v2242, %v2383
      %v2421 = vadd.f32 %v2243, %v2385
      %v2422 = vadd.f32 %v2244, %v2387
      %v2423 = vadd.f32 %v2245, %v2391
      %v2424 = vadd.f32 %v2246, %v2393
      %v2425 = vadd.f32 %v2247, %v2395
      %v2426 = vadd.f32 %v2248, %v2397
      %v2427 = vadd.f32 %v2249, %v2401
      %v2428 = vadd.f32 %v2250, %v2403
      %v2429 = vadd.f32 %v2251, %v2405
      %v2430 = vadd.f32 %v2252, %v2407
      %v2431 = vadd.f32 %v2253, %v2411
      %v2432 = vadd.f32 %v2254, %v2413
      %v2433 = vadd.f32 %v2255, %v2415
      %v2434 = vadd.f32 %v2256, %v2417
      %v2435 = vmax.f32 %v2419, 0.0
      %v2436 = vmax.f32 %v2420, 0.0
      %v2437 = vmax.f32 %v2421, 0.0
      %v2438 = vmax.f32 %v2422, 0.0
      %v2439 = vmax.f32 %v2423, 0.0
      %v2440 = vmax.f32 %v2424, 0.0
      %v2441 = vmax.f32 %v2425, 0.0
      %v2442 = vmax.f32 %v2426, 0.0
      %v2443 = vmax.f32 %v2427, 0.0
      %v2444 = vmax.f32 %v2428, 0.0
      %v2445 = vmax.f32 %v2429, 0.0
      %v2446 = vmax.f32 %v2430, 0.0
      %v2447 = vmax.f32 %v2431, 0.0
      %v2448 = vmax.f32 %v2432, 0.0
      %v2449 = vmax.f32 %v2433, 0.0
      %v2450 = vmax.f32 %v2434, 0.0
      %v2451 = vadd.f32 %v2435, %v2437
      %v2452 = vrot.slane %v2451, 4
      %v2453 = vadd.f32 %v2451, %v2452
      %v2454 = vrot.slane %v2453, 2
      %v2455 = vadd.f32 %v2453, %v2454
      %v2456 = vrot.slane %v2455, 1
      %v2457 = vadd.f32 %v2455, %v2456
      %v2458 = vadd.f32 %v2436, %v2438
      %v2459 = vrot.slane %v2458, 4
      %v2460 = vadd.f32 %v2458, %v2459
      %v2461 = vrot.slane %v2460, 2
      %v2462 = vadd.f32 %v2460, %v2461
      %v2463 = vrot.slane %v2462, 1
      %v2464 = vadd.f32 %v2462, %v2463
      %v2465 = vadd.f32 %v2439, %v2441
      %v2466 = vrot.slane %v2465, 4
      %v2467 = vadd.f32 %v2465, %v2466
      %v2468 = vrot.slane %v2467, 2
      %v2469 = vadd.f32 %v2467, %v2468
      %v2470 = vrot.slane %v2469, 1
      %v2471 = vadd.f32 %v2469, %v2470
      %v2472 = vadd.f32 %v2440, %v2442
      %v2473 = vrot.slane %v2472, 4
      %v2474 = vadd.f32 %v2472, %v2473
      %v2475 = vrot.slane %v2474, 2
      %v2476 = vadd.f32 %v2474, %v2475
      %v2477 = vrot.slane %v2476, 1
      %v2478 = vadd.f32 %v2476, %v2477
      %v2479 = vadd.f32 %v2443, %v2445
      %v2480 = vrot.slane %v2479, 4
      %v2481 = vadd.f32 %v2479, %v2480
      %v2482 = vrot.slane %v2481, 2
      %v2483 = vadd.f32 %v2481, %v2482
      %v2484 = vrot.slane %v2483, 1
      %v2485 = vadd.f32 %v2483, %v2484
      %v2486 = vadd.f32 %v2444, %v2446
      %v2487 = vrot.slane %v2486, 4
      %v2488 = vadd.f32 %v2486, %v2487
      %v2489 = vrot.slane %v2488, 2
      %v2490 = vadd.f32 %v2488, %v2489
      %v2491 = vrot.slane %v2490, 1
      %v2492 = vadd.f32 %v2490, %v2491
      %v2493 = vadd.f32 %v2447, %v2449
      %v2494 = vrot.slane %v2493, 4
      %v2495 = vadd.f32 %v2493, %v2494
      %v2496 = vrot.slane %v2495, 2
      %v2497 = vadd.f32 %v2495, %v2496
      %v2498 = vrot.slane %v2497, 1
      %v2499 = vadd.f32 %v2497, %v2498
      %v2500 = vadd.f32 %v2448, %v2450
      %v2501 = vrot.slane %v2500, 4
      %v2502 = vadd.f32 %v2500, %v2501
      %v2503 = vrot.slane %v2502, 2
      %v2504 = vadd.f32 %v2502, %v2503
      %v2505 = vrot.slane %v2504, 1
      %v2506 = vadd.f32 %v2504, %v2505
      %v2507 = vadd.f32 %v1999, %v2457
      %v2508 = vadd.f32 %v2000, %v2464
      %v2509 = vadd.f32 %v2001, %v2471
      %v2510 = vadd.f32 %v2002, %v2478
      %v2511 = vadd.f32 %v2003, %v2485
      %v2512 = vadd.f32 %v2004, %v2492
      %v2513 = vadd.f32 %v2005, %v2499
      %v2514 = vadd.f32 %v2006, %v2506
      %v2523 = vcombine.low %v2507, %v2508
      %v2525 = vunpack.c.l.s4 1966171168
      %v2526 = vunpack.c.0.s8 %v2525
      %v2527 = vlaneseq
      %v2528 = vshrl.u32 %v2527, 7
      %v2529 = vsub.s32 %v2526, %v2528
      %v2530 = vrot.slane %v2523, %v2529
      %v2532 = vunpack.c.l.s4 1966171168
      %v2533 = vunpack.c.0.s8 %v2532
      %v2534 = vlaneseq
      %v2535 = vshrl.u32 %v2534, 7
      %v2536 = vsub.s32 %v2533, %v2535
      %v2537 = vrot.slane %v2530, %v2536
      %v2538 = vcombine.low %v2509, %v2510
      %v2540 = vunpack.c.l.s4 1966171168
      %v2541 = vunpack.c.0.s8 %v2540
      %v2542 = vlaneseq
      %v2543 = vshrl.u32 %v2542, 7
      %v2544 = vsub.s32 %v2541, %v2543
      %v2545 = vrot.slane %v2538, %v2544
      %v2547 = vunpack.c.l.s4 1966171168
      %v2548 = vunpack.c.0.s8 %v2547
      %v2549 = vlaneseq
      %v2550 = vshrl.u32 %v2549, 7
      %v2551 = vsub.s32 %v2548, %v2550
      %v2552 = vrot.slane %v2545, %v2551
      %v2553 = vcombine.low %v2511, %v2512
      %v2555 = vunpack.c.l.s4 1966171168
      %v2556 = vunpack.c.0.s8 %v2555
      %v2557 = vlaneseq
      %v2558 = vshrl.u32 %v2557, 7
      %v2559 = vsub.s32 %v2556, %v2558
      %v2560 = vrot.slane %v2553, %v2559
      %v2562 = vunpack.c.l.s4 1966171168
      %v2563 = vunpack.c.0.s8 %v2562
      %v2564 = vlaneseq
      %v2565 = vshrl.u32 %v2564, 7
      %v2566 = vsub.s32 %v2563, %v2565
      %v2567 = vrot.slane %v2560, %v2566
      %v2568 = vcombine.low %v2513, %v2514
      %v2570 = vunpack.c.l.s4 1966171168
      %v2571 = vunpack.c.0.s8 %v2570
      %v2572 = vlaneseq
      %v2573 = vshrl.u32 %v2572, 7
      %v2574 = vsub.s32 %v2571, %v2573
      %v2575 = vrot.slane %v2568, %v2574
      %v2577 = vunpack.c.l.s4 1966171168
      %v2578 = vunpack.c.0.s8 %v2577
      %v2579 = vlaneseq
      %v2580 = vshrl.u32 %v2579, 7
      %v2581 = vsub.s32 %v2578, %v2580
      %v2582 = vrot.slane %v2575, %v2581
      %v2587 = vlaneseq
      %vm2588 = vcmp.ge.s32.totalorder %v2587, 0
      %vm2589 = vcmp.lt.s32.totalorder %v2587, 256
      %vm2590 = vmand %vm2588, %vm2589
      %2591 = vst.msk [vmem:[%s256] sm:$0x3] %vm2590, %v2537
      %2592 = vst.msk [vmem:[%s256 + $0x2] sm:$0x3] %vm2590, %v2552
      %2593 = vst.msk [vmem:[%s256 + $0x4] sm:$0x3] %vm2590, %v2567
      %2594 = vst.msk [vmem:[%s256 + $0x6] sm:$0x3] %vm2590, %v2582
      %s2595 = smul.u32 4, %s17
      %p2596 = scmp.lt.s32.totalorder %s2595, 7
      %s2597 = scalar_select %p2596, %s2595, 7
      %s2598 = smul.addr %s2597, 2
      %s2599 = scalar_lea.vmem %s6, %s2598
      // Predicated region
      $region45: #{multi_kernel_forward.1} parent=43 // pred_check
        %p2600 = pneg %p166
      $region46: #{multi_kernel_forward.1} parent=43 // pred_check_branch
        %2602 = sbr.rel (%p2600) target = $region48
      $region47: #{multi_kernel_forward.1} parent=43 // pred_region
        %s2603 = smul.u32 4, %s17
      $region48: #{multi_kernel_forward.1} parent=43 // pred_fallthru
        _
    $region44: #{multi_kernel_forward.1} parent=5 // pred_fallthru
      _
    %p2604 = scmp.le.s32.totalorder 2, %s12
    // Predicated region
    $region49: #{multi_kernel_forward.1} parent=5 // pred_check
      %p2605 = pneg %p2604
    $region50: #{multi_kernel_forward.1} parent=5 // pred_check_branch
      %2607 = sbr.rel (%p2605) target = $region52
    $region51: #{multi_kernel_forward.1} parent=5 // pred_region
      %s2608 = ssub.s32 %s12, 2
      // Predicated region
      $region53: #{multi_kernel_forward.1} parent=51 // pred_check
        %p2609 = pneg %p172
      $region54: #{multi_kernel_forward.1} parent=51 // pred_check_branch
        %2611 = sbr.rel (%p2609) target = $region56
      $region55: #{multi_kernel_forward.1} parent=51 // pred_region
        %s2612 = smul.u32 4, %s18
        %p2613 = scmp.lt.s32.totalorder %s2612, 7
        %s2614 = scalar_select %p2613, %s2612, 7
        %s2615 = smul.addr %s2614, 2
        %s2616 = scalar_lea.vmem %s6, %s2615
      $region56: #{multi_kernel_forward.1} parent=51 // pred_fallthru
        _
    $region52: #{multi_kernel_forward.1} parent=5 // pred_fallthru
      _
  $region6: #{multi_kernel_forward.1} parent=0 // loop_footer
    %s16 = sadd.s32 1, %s12
  $region7: #{multi_kernel_forward.1} parent=0 // loop_footer_branch
    %11 = sbr.rel target = $region3
  $region8: #{multi_kernel_forward.1} parent=0 // loop_exit
    _

</llo_original>
